<compile_context>
chip_gen: v7x
topology: tpu7x:2x2x1
jax: 0.10.0
libtpu: 0.0.40
codegen_flags: <defaults>
</compile_context>

<pallas_src>
import functools

import jax
import jax.numpy as jnp
from jax import lax
from jax.experimental import pallas as pl
from jax.experimental.pallas import tpu as pltpu

LN_EPS = 1e-5       # PyTorch nn.LayerNorm default eps
EDGE_TILE = 512     # E-chunk size for the in-kernel aggregation loop


@functools.lru_cache(maxsize=None)
def _vmem_limit_bytes():
    # Raise v5e's 16 MiB default scoped limit; leave headroom on v7x (64 MiB physical).
    try:
        cap = int(pltpu.get_tpu_info().vmem_capacity_bytes)
    except Exception:
        cap = 64 * 1024 * 1024
    return int(min(max(cap * 3 // 4, 32 * 1024 * 1024), 100 * 1024 * 1024))


# --------------------------------------------------------------------------------------
# Single fused forward kernel
# --------------------------------------------------------------------------------------
def fused_forward_kernel(
    num_graphs, edge_tile,                               # static (closed over)
    x_ref,        # (N, Dn)  f32 node features
    ea_ref,       # (E, De)  f32 edge features (E padded, pad rows are 0)
    src_ref,      # (E, 1)   i32 src node per edge (pad = -1)
    bcol_ref,     # (N, 1)   i32 graph id per node
    idx_ref,      # (3, L)   i32 rows: [dst ; edge_batch ; batch], lane-major, pad = -1
    small_ref,    # (15, Wm) f32 packed biases / LN params / gate row
    wh_ref,       # (Dn+5H, H)   stacked [wn1; wu1; wn2; wu2]
    whh_ref,      # (H+De, H/2)  stacked [wg1; we]
    wf_ref,       # (H+H/2, G)   graph_fusion weight
    o_ref,        # (B, G)   f32 output
):
    N = x_ref.shape[0]
    E = src_ref.shape[0]
    B = num_graphs
    H = wh_ref.shape[1]
    Hh = whh_ref.shape[1]
    G = o_ref.shape[1]
    Dn = wh_ref.shape[0] - 5 * H
    n_chunks = E // edge_tile

    # ---- unpack stacked weights / packed small params (few big DMAs, static slices) --
    wh = wh_ref[...]
    wn1 = wh[0:Dn]
    wu1 = wh[Dn:Dn + 2 * H]
    wn2 = wh[Dn + 2 * H:Dn + 3 * H]
    wu2 = wh[Dn + 3 * H:Dn + 5 * H]
    whh = whh_ref[...]
    wg1 = whh[0:H]
    we = whh[H:]

    sm = small_ref[...]
    bn1, bu1, g1a, b1a = sm[0:1, :H], sm[1:2, :H], sm[2:3, :H], sm[3:4, :H]
    bn2, bu2, g2a, b2a = sm[4:5, :H], sm[5:6, :H], sm[6:7, :H], sm[7:8, :H]
    bg1, wg2r = sm[8:9, :Hh], sm[9:10, :Hh]
    bg2 = sm[10:11, 0:1]
    be = sm[11:12, :Hh]
    bf, fg, fb = sm[12:13, :G], sm[13:14, :G], sm[14:15, :G]

    dst_row = idx_ref[0:1, :E]          # (1, E) i32
    ebatch_row = idx_ref[1:2, :E]       # (1, E) i32
    batch_row = idx_ref[2:3, :N]        # (1, N) i32
    batch_col = bcol_ref[...]           # (N, 1) i32

    def layer_norm(h, gamma, beta):
        mu = jnp.mean(h, axis=-1, keepdims=True)
        var = jnp.mean((h - mu) ** 2, axis=-1, keepdims=True)
        return (h - mu) * lax.rsqrt(var + LN_EPS) * gamma + beta

    # ---- add-aggregation with self loops: sum_{j->i} xp[j] + xp[i] -------------------
    # One-hots built by compare+cast (exact in bf16); gather is (Et,N)@(N,H), scatter
    # is the pre-transposed (N,Et)@(Et,H) -> both natural MXU orientation.
    def agg_chunk(src_c, dst_c, xp_bf):
        et = src_c.shape[0]
        s_src = (src_c == lax.broadcasted_iota(jnp.int32, (et, N), 1)).astype(jnp.bfloat16)
        s_dstT = (dst_c == lax.broadcasted_iota(jnp.int32, (N, et), 0)).astype(jnp.bfloat16)
        gathered = jnp.dot(s_src, xp_bf, preferred_element_type=jnp.float32)      # xp[src]
        return jnp.dot(s_dstT, gathered.astype(jnp.bfloat16),
                       preferred_element_type=jnp.float32)                        # scatter-add

    def aggregate(xp):
        xp_bf = xp.astype(jnp.bfloat16)   # bf16-rounded messages (inference precision)
        if n_chunks == 1:
            return agg_chunk(src_ref[...], dst_row, xp_bf) + xp

        def body(c, acc):
            off = pl.multiple_of(c * edge_tile, edge_tile)
            src_c = src_ref[pl.ds(off, edge_tile), :]
            dst_c = lax.dynamic_slice_in_dim(dst_row, off, edge_tile, axis=1)
            return acc + agg_chunk(src_c, dst_c, xp_bf)

        return lax.fori_loop(0, n_chunks, body, xp)   # start from xp == self loop term

    # ---- EdgeAwareGNN layer (node_proj -> propagate(add) -> fused update_fc -> LN) ---
    def gnn_layer(h_in, wn, bn, wu, bu, gamma, beta):
        xp = jnp.dot(h_in, wn, preferred_element_type=jnp.float32) + bn           # node_proj
        agg = aggregate(xp)
        upd = jnp.concatenate([xp, agg], axis=1)                                  # (N, 2H)
        h = jnp.maximum(jnp.dot(upd, wu, preferred_element_type=jnp.float32) + bu, 0.0)
        return layer_norm(h, gamma, beta)                                         # Dropout=id

    h1 = gnn_layer(x_ref[...], wn1, bn1, wu1, bu1, g1a, b1a)
    h2 = gnn_layer(h1, wn2, bn2, wu2, bu2, g2a, b2a)

    # ---- GlobalAttention node pooling -------------------------------------------------
    member = (batch_col == lax.broadcasted_iota(jnp.int32, (N, B), 1))            # (N,B) bool
    s_graph = member.astype(jnp.float32)                                          # (N,B)
    s_graphT = (batch_row == lax.broadcasted_iota(jnp.int32, (B, N), 0)).astype(jnp.float32)

    g1 = jnp.maximum(jnp.dot(h2, wg1, preferred_element_type=jnp.float32) + bg1, 0.0)
    gate = jnp.sum(g1 * wg2r, axis=-1, keepdims=True) + bg2                       # (N,1)

    neg = jnp.float32(-1e30)
    scores = jnp.where(member, gate, neg)                                         # (N,B)
    m = jnp.max(scores, axis=0, keepdims=True)                                    # (1,B)
    m_node = jnp.sum(s_graph * m, axis=-1, keepdims=True)                         # (N,1)
    e_node = jnp.exp(gate - m_node)                                               # (N,1)

    # fused numerator + denominator: one (B,N)@(N,H+1) matmul
    weighted_aug = jnp.concatenate([h2 * e_node, e_node], axis=1)                 # (N,H+1)
    nd = jnp.dot(s_graphT, weighted_aug, preferred_element_type=jnp.float32)      # (B,H+1)
    denom = jnp.maximum(nd[:, H:H + 1], jnp.float32(1e-30))                       # empty-graph guard
    node_emb = nd[:, :H] / denom                                                  # exact division

    # ---- edge global_add_pool -> edge_pooling MLP -------------------------------------
    s_edgeT = (ebatch_row == lax.broadcasted_iota(jnp.int32, (B, E), 0)).astype(jnp.float32)
    edge_sum = jnp.dot(s_edgeT, ea_ref[...], preferred_element_type=jnp.float32)  # (B,De)
    edge_emb = jnp.maximum(
        jnp.dot(edge_sum, we, preferred_element_type=jnp.float32) + be, 0.0)

    # ---- graph_fusion: Linear(cat([node_emb, edge_emb])) + LayerNorm ------------------
    fused = jnp.concatenate([node_emb, edge_emb], axis=1)                         # (B, H+H/2)
    graph = jnp.dot(fused, wf_ref[...], preferred_element_type=jnp.float32) + bf
    o_ref[...] = layer_norm(graph, fg, fb)


# --------------------------------------------------------------------------------------
# Parameter init (deterministic; mimics PyTorch Linear default U(-1/sqrt(fan_in), +))
# --------------------------------------------------------------------------------------
def init_linear(key, fan_in, fan_out):
    k1, k2 = jax.random.split(key)
    bound = 1.0 / (fan_in ** 0.5)
    w = jax.random.uniform(k1, (fan_in, fan_out), jnp.float32, -bound, bound)
    b = jax.random.uniform(k2, (1, fan_out), jnp.float32, -bound, bound)
    return w, b


def init_params(key, node_dim, edge_dim, hidden, graph_dim):
    keys = jax.random.split(key, 6)

    def gnn_params(kk, din):
        k = jax.random.split(kk, 2)
        wn, bn = init_linear(k[0], din, hidden)
        wu, bu = init_linear(k[1], 2 * hidden, hidden)
        return {"wn": wn, "bn": bn, "wu": wu, "bu": bu,
                "gamma": jnp.ones((1, hidden), jnp.float32),
                "beta": jnp.zeros((1, hidden), jnp.float32)}

    params = {"gnn1": gnn_params(keys[0], node_dim),
              "gnn2": gnn_params(keys[1], hidden)}

    # node_gate: Linear(H, H/2) -> ReLU -> Linear(H/2, 1)
    wg1, bg1 = init_linear(keys[2], hidden, hidden // 2)
    wg2, bg2 = init_linear(keys[3], hidden // 2, 1)
    params["pool"] = {"wg1": wg1, "bg1": bg1,
                      "wg2": wg2.T,            # stored as (1, H/2) for lane-reduction
                      "bg2": bg2}              # (1, 1)

    # edge_pooling: Linear(edge_dim, H/2); graph_fusion: Linear(H + H/2, G) + LayerNorm(G)
    we, be = init_linear(keys[4], edge_dim, hidden // 2)
    wf, bf = init_linear(keys[5], hidden + hidden // 2, graph_dim)
    params["fuse"] = {"we": we, "be": be, "wf": wf, "bf": bf,
                      "gamma": jnp.ones((1, graph_dim), jnp.float32),
                      "beta": jnp.zeros((1, graph_dim), jnp.float32)}
    params["temperature"] = jnp.float32(0.1)   # unused in forward(), kept for fidelity
    return params


# --------------------------------------------------------------------------------------
# Forward pass: one fused pallas_call with packed inputs
# --------------------------------------------------------------------------------------
@functools.partial(jax.jit, static_argnames=("num_graphs",))
def code_similarity_forward(x, edge_index, edge_attr, batch, params, num_graphs):
    N = x.shape[0]
    E = edge_attr.shape[0]

    src = edge_index[0].astype(jnp.int32)
    dst = edge_index[1].astype(jnp.int32)
    batch = batch.astype(jnp.int32)
    edge_batch = batch[src]                     # == batch[edge_index[0]] (PyG convention)

    # pad E up to a multiple of the aggregation tile; sentinel -1 => zero one-hot rows
    if E <= EDGE_TILE:
        e_pad, edge_tile = E, E
    else:
        e_pad = ((E + EDGE_TILE - 1) // EDGE_TILE) * EDGE_TILE
        edge_tile = EDGE_TILE
    pad = e_pad - E
    if pad:
        fill = jnp.full((pad,), -1, jnp.int32)
        src = jnp.concatenate([src, fill])
        dst = jnp.concatenate([dst, fill])
        edge_batch = jnp.concatenate([edge_batch, fill])
        edge_attr = jnp.concatenate(
            [edge_attr, jnp.zeros((pad, edge_attr.shape[1]), edge_attr.dtype)])

    p1, p2 = params["gnn1"], params["gnn2"]
    pp, pf = params["pool"], params["fuse"]
    H = p1["wn"].shape[1]
    Hh = pp["wg1"].shape[1]
    G = pf["wf"].shape[1]

    # --- pack dst / edge_batch / batch lane-major into one (3, L) int32 array ----------
    L = max(e_pad, N)

    def _row(v):
        return jnp.pad(v, (0, L - v.shape[0]), constant_values=-1)[None, :]

    idx_rows = jnp.concatenate([_row(dst), _row(edge_batch), _row(batch)], axis=0)

    # --- pack all tiny (1,·) parameters into a single array (one prologue DMA) ---------
    wmax = max(H, Hh, G, 1)

    def _prow(v):
        v = jnp.asarray(v, jnp.float32).reshape(1, -1)
        return jnp.pad(v, ((0, 0), (0, wmax - v.shape[1])))

    small = jnp.concatenate([
        _prow(p1["bn"]), _prow(p1["bu"]), _prow(p1["gamma"]), _prow(p1["beta"]),
        _prow(p2["bn"]), _prow(p2["bu"]), _prow(p2["gamma"]), _prow(p2["beta"]),
        _prow(pp["bg1"]), _prow(pp["wg2"]), _prow(pp["bg2"]),
        _prow(pf["be"]), _prow(pf["bf"]), _prow(pf["gamma"]), _prow(pf["beta"]),
    ], axis=0)

    # --- stack weight matrices by column width (3 DMAs instead of 7) -------------------
    w_h = jnp.concatenate([p1["wn"], p1["wu"], p2["wn"], p2["wu"]], axis=0)   # (Dn+5H, H)
    w_hh = jnp.concatenate([pp["wg1"], pf["we"]], axis=0)                     # (H+De, H/2)
    w_f = pf["wf"]                                                            # (H+H/2, G)

    args = (x, edge_attr, src[:, None], batch[:, None], idx_rows, small, w_h, w_hh, w_f)

    kernel = functools.partial(fused_forward_kernel, num_graphs, edge_tile)
    return pl.pallas_call(
        kernel,
        out_shape=jax.ShapeDtypeStruct((num_graphs, G), jnp.float32),
        in_specs=[pl.BlockSpec(memory_space=pltpu.MemorySpace.VMEM) for _ in args],
        out_specs=pl.BlockSpec(memory_space=pltpu.MemorySpace.VMEM),
        compiler_params=pltpu.CompilerParams(vmem_limit_bytes=_vmem_limit_bytes()),
    )(*args)


def compute_similarity(emb1, emb2):
    num = jnp.sum(emb1 * emb2, axis=-1)
    den = jnp.linalg.norm(emb1, axis=-1) * jnp.linalg.norm(emb2, axis=-1)
    return num / jnp.maximum(den, 1e-8)


# --------------------------------------------------------------------------------------
if __name__ == "__main__":
    NODE_DIM, EDGE_DIM, HIDDEN, GRAPH_DIM = 64, 64, 32, 16
    N, E, B = 16, 24, 2                      # 16 nodes, 24 edges, 2 graphs in the batch

    key = jax.random.PRNGKey(0)
    kx, ke, ks0, kd0, ks1, kd1, kp = jax.random.split(key, 7)

    x = jax.random.normal(kx, (N, NODE_DIM), jnp.float32)
    edge_attr = jax.random.normal(ke, (E, EDGE_DIM), jnp.float32)
    batch = jnp.concatenate([jnp.zeros(N // 2, jnp.int32), jnp.ones(N // 2, jnp.int32)])

    # 12 edges inside graph 0 (nodes 0..7), 12 edges inside graph 1 (nodes 8..15)
    src0 = jax.random.randint(ks0, (E // 2,), 0, N // 2)
    dst0 = jax.random.randint(kd0, (E // 2,), 0, N // 2)
    src1 = jax.random.randint(ks1, (E // 2,), N // 2, N)
    dst1 = jax.random.randint(kd1, (E // 2,), N // 2, N)
    edge_index = jnp.stack([jnp.concatenate([src0, src1]),
                            jnp.concatenate([dst0, dst1])]).astype(jnp.int32)   # (2, E)

    params = init_params(kp, NODE_DIM, EDGE_DIM, HIDDEN, GRAPH_DIM)

    graph_emb = code_similarity_forward(x, edge_index, edge_attr, batch, params, B)
    graph_emb = jax.block_until_ready(graph_emb)

    assert graph_emb.shape == (B, GRAPH_DIM)
    assert bool(jnp.all(jnp.isfinite(graph_emb)))

    # exercise compute_similarity path as well (embedding vs itself -> ~1.0)
    sim = jax.block_until_ready(compute_similarity(graph_emb, graph_emb))
    assert sim.shape == (B,)
    assert bool(jnp.all(jnp.isfinite(sim)))

    print("KERNEL_OK")
</pallas_src>

<mosaic_0001>
module attributes {stable_mosaic.version = 11 : i64} {
  func.func @fused_forward_kernel(%arg0: memref<16x64xf32, #tpu.memory_space<vmem>>, %arg1: memref<24x64xf32, #tpu.memory_space<vmem>>, %arg2: memref<24x1xi32, #tpu.memory_space<vmem>>, %arg3: memref<16x1xi32, #tpu.memory_space<vmem>>, %arg4: memref<3x24xi32, #tpu.memory_space<vmem>>, %arg5: memref<15x32xf32, #tpu.memory_space<vmem>>, %arg6: memref<224x32xf32, #tpu.memory_space<vmem>>, %arg7: memref<96x16xf32, #tpu.memory_space<vmem>>, %arg8: memref<48x16xf32, #tpu.memory_space<vmem>>, %arg9: memref<2x16xf32, #tpu.memory_space<vmem>>) attributes {dimension_semantics = [], scalar_prefetch = 0 : i64, scratch_operands = 0 : i64, tpu.core_type = #tpu.core_type<tc>} {
    %c0 = arith.constant 0 : index
    %c0_0 = arith.constant 0 : index
    %0 = vector.load %arg6[%c0, %c0_0] : memref<224x32xf32, #tpu.memory_space<vmem>>, vector<224x32xf32>
    %1 = vector.extract_strided_slice %0 {offsets = [0, 0], sizes = [64, 32], strides = [1, 1]} : vector<224x32xf32> to vector<64x32xf32>
    %2 = vector.extract_strided_slice %0 {offsets = [64, 0], sizes = [64, 32], strides = [1, 1]} : vector<224x32xf32> to vector<64x32xf32>
    %3 = vector.extract_strided_slice %0 {offsets = [128, 0], sizes = [32, 32], strides = [1, 1]} : vector<224x32xf32> to vector<32x32xf32>
    %4 = vector.extract_strided_slice %0 {offsets = [160, 0], sizes = [64, 32], strides = [1, 1]} : vector<224x32xf32> to vector<64x32xf32>
    %c0_1 = arith.constant 0 : index
    %c0_2 = arith.constant 0 : index
    %5 = vector.load %arg7[%c0_1, %c0_2] : memref<96x16xf32, #tpu.memory_space<vmem>>, vector<96x16xf32>
    %6 = vector.extract_strided_slice %5 {offsets = [0, 0], sizes = [32, 16], strides = [1, 1]} : vector<96x16xf32> to vector<32x16xf32>
    %7 = vector.extract_strided_slice %5 {offsets = [32, 0], sizes = [64, 16], strides = [1, 1]} : vector<96x16xf32> to vector<64x16xf32>
    %c0_3 = arith.constant 0 : index
    %c0_4 = arith.constant 0 : index
    %8 = vector.load %arg5[%c0_3, %c0_4] : memref<15x32xf32, #tpu.memory_space<vmem>>, vector<15x32xf32>
    %9 = vector.extract_strided_slice %8 {offsets = [0, 0], sizes = [1, 32], strides = [1, 1]} : vector<15x32xf32> to vector<1x32xf32>
    %10 = vector.extract_strided_slice %8 {offsets = [1, 0], sizes = [1, 32], strides = [1, 1]} : vector<15x32xf32> to vector<1x32xf32>
    %11 = vector.extract_strided_slice %8 {offsets = [2, 0], sizes = [1, 32], strides = [1, 1]} : vector<15x32xf32> to vector<1x32xf32>
    %12 = vector.extract_strided_slice %8 {offsets = [3, 0], sizes = [1, 32], strides = [1, 1]} : vector<15x32xf32> to vector<1x32xf32>
    %13 = vector.extract_strided_slice %8 {offsets = [4, 0], sizes = [1, 32], strides = [1, 1]} : vector<15x32xf32> to vector<1x32xf32>
    %14 = vector.extract_strided_slice %8 {offsets = [5, 0], sizes = [1, 32], strides = [1, 1]} : vector<15x32xf32> to vector<1x32xf32>
    %15 = vector.extract_strided_slice %8 {offsets = [6, 0], sizes = [1, 32], strides = [1, 1]} : vector<15x32xf32> to vector<1x32xf32>
    %16 = vector.extract_strided_slice %8 {offsets = [7, 0], sizes = [1, 32], strides = [1, 1]} : vector<15x32xf32> to vector<1x32xf32>
    %17 = vector.extract_strided_slice %8 {offsets = [8, 0], sizes = [1, 16], strides = [1, 1]} : vector<15x32xf32> to vector<1x16xf32>
    %18 = vector.extract_strided_slice %8 {offsets = [9, 0], sizes = [1, 16], strides = [1, 1]} : vector<15x32xf32> to vector<1x16xf32>
    %19 = vector.extract_strided_slice %8 {offsets = [10, 0], sizes = [1, 1], strides = [1, 1]} : vector<15x32xf32> to vector<1x1xf32>
    %20 = vector.extract_strided_slice %8 {offsets = [11, 0], sizes = [1, 16], strides = [1, 1]} : vector<15x32xf32> to vector<1x16xf32>
    %21 = vector.extract_strided_slice %8 {offsets = [12, 0], sizes = [1, 16], strides = [1, 1]} : vector<15x32xf32> to vector<1x16xf32>
    %22 = vector.extract_strided_slice %8 {offsets = [13, 0], sizes = [1, 16], strides = [1, 1]} : vector<15x32xf32> to vector<1x16xf32>
    %23 = vector.extract_strided_slice %8 {offsets = [14, 0], sizes = [1, 16], strides = [1, 1]} : vector<15x32xf32> to vector<1x16xf32>
    %c0_5 = arith.constant 0 : index
    %c0_6 = arith.constant 0 : index
    %24 = vector.load %arg4[%c0_5, %c0_6] : memref<3x24xi32, #tpu.memory_space<vmem>>, vector<1x24xi32>
    %c1 = arith.constant 1 : index
    %c0_7 = arith.constant 0 : index
    %25 = vector.load %arg4[%c1, %c0_7] : memref<3x24xi32, #tpu.memory_space<vmem>>, vector<1x24xi32>
    %c2 = arith.constant 2 : index
    %c0_8 = arith.constant 0 : index
    %26 = vector.load %arg4[%c2, %c0_8] : memref<3x24xi32, #tpu.memory_space<vmem>>, vector<1x16xi32>
    %c0_9 = arith.constant 0 : index
    %c0_10 = arith.constant 0 : index
    %27 = vector.load %arg3[%c0_9, %c0_10] : memref<16x1xi32, #tpu.memory_space<vmem>>, vector<16x1xi32>
    %c0_11 = arith.constant 0 : index
    %c0_12 = arith.constant 0 : index
    %28 = vector.load %arg0[%c0_11, %c0_12] : memref<16x64xf32, #tpu.memory_space<vmem>>, vector<16x64xf32>
    %cst = arith.constant dense<0.000000e+00> : vector<16x32xf32>
    %29 = tpu.matmul %28, %1, %cst {dimension_numbers = #tpu.dot_dimension_numbers<[1], [0], [0], [1], [0, 0, 1, 1], [], []>} : vector<16x64xf32>, vector<64x32xf32>, vector<16x32xf32> -> vector<16x32xf32>
    %30 = vector.broadcast %9 : vector<1x32xf32> to vector<16x32xf32>
    %31 = arith.addf %29, %30 : vector<16x32xf32>
    %32 = arith.truncf %31 : vector<16x32xf32> to vector<16x32xbf16>
    %c0_13 = arith.constant 0 : index
    %c0_14 = arith.constant 0 : index
    %33 = vector.load %arg2[%c0_13, %c0_14] : memref<24x1xi32, #tpu.memory_space<vmem>>, vector<24x1xi32>
    %34 = tpu.iota {dimensions = array<i32: 1>} : vector<24x16xi32>
    %35 = vector.broadcast %33 : vector<24x1xi32> to vector<24x16xi32>
    %36 = arith.cmpi eq, %35, %34 : vector<24x16xi32>
    %37 = arith.extui %36 : vector<24x16xi1> to vector<24x16xi32>
    %38 = arith.sitofp %37 : vector<24x16xi32> to vector<24x16xf32>
    %39 = arith.truncf %38 : vector<24x16xf32> to vector<24x16xbf16>
    %40 = tpu.iota {dimensions = array<i32: 0>} : vector<16x24xi32>
    %41 = vector.broadcast %24 : vector<1x24xi32> to vector<16x24xi32>
    %42 = arith.cmpi eq, %41, %40 : vector<16x24xi32>
    %43 = arith.extui %42 : vector<16x24xi1> to vector<16x24xi32>
    %44 = arith.sitofp %43 : vector<16x24xi32> to vector<16x24xf32>
    %45 = arith.truncf %44 : vector<16x24xf32> to vector<16x24xbf16>
    %cst_15 = arith.constant dense<0.000000e+00> : vector<24x32xf32>
    %46 = tpu.matmul %39, %32, %cst_15 {dimension_numbers = #tpu.dot_dimension_numbers<[1], [0], [0], [1], [0, 0, 1, 1], [], []>} : vector<24x16xbf16>, vector<16x32xbf16>, vector<24x32xf32> -> vector<24x32xf32>
    %47 = arith.truncf %46 : vector<24x32xf32> to vector<24x32xbf16>
    %cst_16 = arith.constant dense<0.000000e+00> : vector<16x32xf32>
    %48 = tpu.matmul %45, %47, %cst_16 {dimension_numbers = #tpu.dot_dimension_numbers<[1], [0], [0], [1], [0, 0, 1, 1], [], []>} : vector<16x24xbf16>, vector<24x32xbf16>, vector<16x32xf32> -> vector<16x32xf32>
    %49 = arith.addf %48, %31 : vector<16x32xf32>
    %50 = tpu.concatenate %31, %49 in 1 : vector<16x32xf32>, vector<16x32xf32> -> vector<16x64xf32>
    %cst_17 = arith.constant dense<0.000000e+00> : vector<16x32xf32>
    %51 = tpu.matmul %50, %2, %cst_17 {dimension_numbers = #tpu.dot_dimension_numbers<[1], [0], [0], [1], [0, 0, 1, 1], [], []>} : vector<16x64xf32>, vector<64x32xf32>, vector<16x32xf32> -> vector<16x32xf32>
    %52 = vector.broadcast %10 : vector<1x32xf32> to vector<16x32xf32>
    %53 = arith.addf %51, %52 : vector<16x32xf32>
    %cst_18 = arith.constant 0.000000e+00 : f32
    %54 = vector.broadcast %cst_18 : f32 to vector<16x32xf32>
    %55 = arith.maximumf %53, %54 : vector<16x32xf32>
    %cst_19 = arith.constant dense<0.000000e+00> : vector<16xf32>
    %56 = vector.multi_reduction <add>, %55, %cst_19 [1] : vector<16x32xf32> to vector<16xf32>
    %57 = vector.shape_cast %56 : vector<16xf32> to vector<16x1xf32>
    %cst_20 = arith.constant 3.200000e+01 : f32
    %58 = vector.broadcast %cst_20 : f32 to vector<16x1xf32>
    %59 = arith.divf %57, %58 : vector<16x1xf32>
    %60 = vector.broadcast %59 : vector<16x1xf32> to vector<16x32xf32>
    %61 = arith.subf %55, %60 : vector<16x32xf32>
    %62 = arith.mulf %61, %61 : vector<16x32xf32>
    %cst_21 = arith.constant dense<0.000000e+00> : vector<16xf32>
    %63 = vector.multi_reduction <add>, %62, %cst_21 [1] : vector<16x32xf32> to vector<16xf32>
    %64 = vector.shape_cast %63 : vector<16xf32> to vector<16x1xf32>
    %cst_22 = arith.constant 3.200000e+01 : f32
    %65 = vector.broadcast %cst_22 : f32 to vector<16x1xf32>
    %66 = arith.divf %64, %65 : vector<16x1xf32>
    %67 = vector.broadcast %59 : vector<16x1xf32> to vector<16x32xf32>
    %68 = arith.subf %55, %67 : vector<16x32xf32>
    %cst_23 = arith.constant 9.99999974E-6 : f32
    %69 = vector.broadcast %cst_23 : f32 to vector<16x1xf32>
    %70 = arith.addf %66, %69 : vector<16x1xf32>
    %71 = math.rsqrt %70 : vector<16x1xf32>
    %72 = vector.broadcast %71 : vector<16x1xf32> to vector<16x32xf32>
    %73 = arith.mulf %68, %72 : vector<16x32xf32>
    %74 = vector.broadcast %11 : vector<1x32xf32> to vector<16x32xf32>
    %75 = arith.mulf %73, %74 : vector<16x32xf32>
    %76 = vector.broadcast %12 : vector<1x32xf32> to vector<16x32xf32>
    %77 = arith.addf %75, %76 : vector<16x32xf32>
    %cst_24 = arith.constant dense<0.000000e+00> : vector<16x32xf32>
    %78 = tpu.matmul %77, %3, %cst_24 {dimension_numbers = #tpu.dot_dimension_numbers<[1], [0], [0], [1], [0, 0, 1, 1], [], []>} : vector<16x32xf32>, vector<32x32xf32>, vector<16x32xf32> -> vector<16x32xf32>
    %79 = vector.broadcast %13 : vector<1x32xf32> to vector<16x32xf32>
    %80 = arith.addf %78, %79 : vector<16x32xf32>
    %81 = arith.truncf %80 : vector<16x32xf32> to vector<16x32xbf16>
    %c0_25 = arith.constant 0 : index
    %c0_26 = arith.constant 0 : index
    %82 = vector.load %arg2[%c0_25, %c0_26] : memref<24x1xi32, #tpu.memory_space<vmem>>, vector<24x1xi32>
    %83 = tpu.iota {dimensions = array<i32: 1>} : vector<24x16xi32>
    %84 = vector.broadcast %82 : vector<24x1xi32> to vector<24x16xi32>
    %85 = arith.cmpi eq, %84, %83 : vector<24x16xi32>
    %86 = arith.extui %85 : vector<24x16xi1> to vector<24x16xi32>
    %87 = arith.sitofp %86 : vector<24x16xi32> to vector<24x16xf32>
    %88 = arith.truncf %87 : vector<24x16xf32> to vector<24x16xbf16>
    %89 = tpu.iota {dimensions = array<i32: 0>} : vector<16x24xi32>
    %90 = vector.broadcast %24 : vector<1x24xi32> to vector<16x24xi32>
    %91 = arith.cmpi eq, %90, %89 : vector<16x24xi32>
    %92 = arith.extui %91 : vector<16x24xi1> to vector<16x24xi32>
    %93 = arith.sitofp %92 : vector<16x24xi32> to vector<16x24xf32>
    %94 = arith.truncf %93 : vector<16x24xf32> to vector<16x24xbf16>
    %cst_27 = arith.constant dense<0.000000e+00> : vector<24x32xf32>
    %95 = tpu.matmul %88, %81, %cst_27 {dimension_numbers = #tpu.dot_dimension_numbers<[1], [0], [0], [1], [0, 0, 1, 1], [], []>} : vector<24x16xbf16>, vector<16x32xbf16>, vector<24x32xf32> -> vector<24x32xf32>
    %96 = arith.truncf %95 : vector<24x32xf32> to vector<24x32xbf16>
    %cst_28 = arith.constant dense<0.000000e+00> : vector<16x32xf32>
    %97 = tpu.matmul %94, %96, %cst_28 {dimension_numbers = #tpu.dot_dimension_numbers<[1], [0], [0], [1], [0, 0, 1, 1], [], []>} : vector<16x24xbf16>, vector<24x32xbf16>, vector<16x32xf32> -> vector<16x32xf32>
    %98 = arith.addf %97, %80 : vector<16x32xf32>
    %99 = tpu.concatenate %80, %98 in 1 : vector<16x32xf32>, vector<16x32xf32> -> vector<16x64xf32>
    %cst_29 = arith.constant dense<0.000000e+00> : vector<16x32xf32>
    %100 = tpu.matmul %99, %4, %cst_29 {dimension_numbers = #tpu.dot_dimension_numbers<[1], [0], [0], [1], [0, 0, 1, 1], [], []>} : vector<16x64xf32>, vector<64x32xf32>, vector<16x32xf32> -> vector<16x32xf32>
    %101 = vector.broadcast %14 : vector<1x32xf32> to vector<16x32xf32>
    %102 = arith.addf %100, %101 : vector<16x32xf32>
    %cst_30 = arith.constant 0.000000e+00 : f32
    %103 = vector.broadcast %cst_30 : f32 to vector<16x32xf32>
    %104 = arith.maximumf %102, %103 : vector<16x32xf32>
    %cst_31 = arith.constant dense<0.000000e+00> : vector<16xf32>
    %105 = vector.multi_reduction <add>, %104, %cst_31 [1] : vector<16x32xf32> to vector<16xf32>
    %106 = vector.shape_cast %105 : vector<16xf32> to vector<16x1xf32>
    %cst_32 = arith.constant 3.200000e+01 : f32
    %107 = vector.broadcast %cst_32 : f32 to vector<16x1xf32>
    %108 = arith.divf %106, %107 : vector<16x1xf32>
    %109 = vector.broadcast %108 : vector<16x1xf32> to vector<16x32xf32>
    %110 = arith.subf %104, %109 : vector<16x32xf32>
    %111 = arith.mulf %110, %110 : vector<16x32xf32>
    %cst_33 = arith.constant dense<0.000000e+00> : vector<16xf32>
    %112 = vector.multi_reduction <add>, %111, %cst_33 [1] : vector<16x32xf32> to vector<16xf32>
    %113 = vector.shape_cast %112 : vector<16xf32> to vector<16x1xf32>
    %cst_34 = arith.constant 3.200000e+01 : f32
    %114 = vector.broadcast %cst_34 : f32 to vector<16x1xf32>
    %115 = arith.divf %113, %114 : vector<16x1xf32>
    %116 = vector.broadcast %108 : vector<16x1xf32> to vector<16x32xf32>
    %117 = arith.subf %104, %116 : vector<16x32xf32>
    %cst_35 = arith.constant 9.99999974E-6 : f32
    %118 = vector.broadcast %cst_35 : f32 to vector<16x1xf32>
    %119 = arith.addf %115, %118 : vector<16x1xf32>
    %120 = math.rsqrt %119 : vector<16x1xf32>
    %121 = vector.broadcast %120 : vector<16x1xf32> to vector<16x32xf32>
    %122 = arith.mulf %117, %121 : vector<16x32xf32>
    %123 = vector.broadcast %15 : vector<1x32xf32> to vector<16x32xf32>
    %124 = arith.mulf %122, %123 : vector<16x32xf32>
    %125 = vector.broadcast %16 : vector<1x32xf32> to vector<16x32xf32>
    %126 = arith.addf %124, %125 : vector<16x32xf32>
    %127 = tpu.iota {dimensions = array<i32: 1>} : vector<16x2xi32>
    %128 = vector.broadcast %27 : vector<16x1xi32> to vector<16x2xi32>
    %129 = arith.cmpi eq, %128, %127 : vector<16x2xi32>
    %130 = arith.extui %129 : vector<16x2xi1> to vector<16x2xi32>
    %131 = arith.sitofp %130 : vector<16x2xi32> to vector<16x2xf32>
    %132 = tpu.iota {dimensions = array<i32: 0>} : vector<2x16xi32>
    %133 = vector.broadcast %26 : vector<1x16xi32> to vector<2x16xi32>
    %134 = arith.cmpi eq, %133, %132 : vector<2x16xi32>
    %135 = arith.extui %134 : vector<2x16xi1> to vector<2x16xi32>
    %136 = arith.sitofp %135 : vector<2x16xi32> to vector<2x16xf32>
    %cst_36 = arith.constant dense<0.000000e+00> : vector<16x16xf32>
    %137 = tpu.matmul %126, %6, %cst_36 {dimension_numbers = #tpu.dot_dimension_numbers<[1], [0], [0], [1], [0, 0, 1, 1], [], []>} : vector<16x32xf32>, vector<32x16xf32>, vector<16x16xf32> -> vector<16x16xf32>
    %138 = vector.broadcast %17 : vector<1x16xf32> to vector<16x16xf32>
    %139 = arith.addf %137, %138 : vector<16x16xf32>
    %cst_37 = arith.constant 0.000000e+00 : f32
    %140 = vector.broadcast %cst_37 : f32 to vector<16x16xf32>
    %141 = arith.maximumf %139, %140 : vector<16x16xf32>
    %142 = vector.broadcast %18 : vector<1x16xf32> to vector<16x16xf32>
    %143 = arith.mulf %141, %142 : vector<16x16xf32>
    %cst_38 = arith.constant dense<0.000000e+00> : vector<16xf32>
    %144 = vector.multi_reduction <add>, %143, %cst_38 [1] : vector<16x16xf32> to vector<16xf32>
    %145 = vector.shape_cast %144 : vector<16xf32> to vector<16x1xf32>
    %146 = vector.broadcast %19 : vector<1x1xf32> to vector<16x1xf32>
    %147 = arith.addf %145, %146 : vector<16x1xf32>
    %cst_39 = arith.constant -1.000000e+30 : f32
    %148 = vector.shape_cast %147 : vector<16x1xf32> to vector<16x1xf32>
    %149 = vector.broadcast %148 : vector<16x1xf32> to vector<16x2xf32>
    %150 = vector.broadcast %cst_39 : f32 to vector<16x2xf32>
    %151 = arith.select %129, %149, %150 : vector<16x2xi1>, vector<16x2xf32>
    %cst_40 = arith.constant dense<0xFF800000> : vector<2xf32>
    %152 = vector.multi_reduction <maximumf>, %151, %cst_40 [0] : vector<16x2xf32> to vector<2xf32>
    %153 = vector.shape_cast %152 : vector<2xf32> to vector<1x2xf32>
    %154 = vector.broadcast %153 : vector<1x2xf32> to vector<16x2xf32>
    %155 = arith.mulf %131, %154 : vector<16x2xf32>
    %cst_41 = arith.constant dense<0.000000e+00> : vector<16xf32>
    %156 = vector.multi_reduction <add>, %155, %cst_41 [1] : vector<16x2xf32> to vector<16xf32>
    %157 = vector.shape_cast %156 : vector<16xf32> to vector<16x1xf32>
    %158 = arith.subf %147, %157 : vector<16x1xf32>
    %159 = math.exp %158 : vector<16x1xf32>
    %160 = vector.broadcast %159 : vector<16x1xf32> to vector<16x32xf32>
    %161 = arith.mulf %126, %160 : vector<16x32xf32>
    %162 = tpu.concatenate %161, %159 in 1 : vector<16x32xf32>, vector<16x1xf32> -> vector<16x33xf32>
    %cst_42 = arith.constant dense<0.000000e+00> : vector<2x33xf32>
    %163 = tpu.matmul %136, %162, %cst_42 {dimension_numbers = #tpu.dot_dimension_numbers<[1], [0], [0], [1], [0, 0, 1, 1], [], []>} : vector<2x16xf32>, vector<16x33xf32>, vector<2x33xf32> -> vector<2x33xf32>
    %164 = vector.extract_strided_slice %163 {offsets = [0, 32], sizes = [2, 1], strides = [1, 1]} : vector<2x33xf32> to vector<2x1xf32>
    %cst_43 = arith.constant 1.000000e-30 : f32
    %165 = vector.broadcast %cst_43 : f32 to vector<2x1xf32>
    %166 = arith.maximumf %164, %165 : vector<2x1xf32>
    %167 = vector.extract_strided_slice %163 {offsets = [0, 0], sizes = [2, 32], strides = [1, 1]} : vector<2x33xf32> to vector<2x32xf32>
    %168 = vector.broadcast %166 : vector<2x1xf32> to vector<2x32xf32>
    %169 = arith.divf %167, %168 : vector<2x32xf32>
    %170 = tpu.iota {dimensions = array<i32: 0>} : vector<2x24xi32>
    %171 = vector.broadcast %25 : vector<1x24xi32> to vector<2x24xi32>
    %172 = arith.cmpi eq, %171, %170 : vector<2x24xi32>
    %173 = arith.extui %172 : vector<2x24xi1> to vector<2x24xi32>
    %174 = arith.sitofp %173 : vector<2x24xi32> to vector<2x24xf32>
    %c0_44 = arith.constant 0 : index
    %c0_45 = arith.constant 0 : index
    %175 = vector.load %arg1[%c0_44, %c0_45] : memref<24x64xf32, #tpu.memory_space<vmem>>, vector<24x64xf32>
    %cst_46 = arith.constant dense<0.000000e+00> : vector<2x64xf32>
    %176 = tpu.matmul %174, %175, %cst_46 {dimension_numbers = #tpu.dot_dimension_numbers<[1], [0], [0], [1], [0, 0, 1, 1], [], []>} : vector<2x24xf32>, vector<24x64xf32>, vector<2x64xf32> -> vector<2x64xf32>
    %cst_47 = arith.constant dense<0.000000e+00> : vector<2x16xf32>
    %177 = tpu.matmul %176, %7, %cst_47 {dimension_numbers = #tpu.dot_dimension_numbers<[1], [0], [0], [1], [0, 0, 1, 1], [], []>} : vector<2x64xf32>, vector<64x16xf32>, vector<2x16xf32> -> vector<2x16xf32>
    %178 = vector.broadcast %20 : vector<1x16xf32> to vector<2x16xf32>
    %179 = arith.addf %177, %178 : vector<2x16xf32>
    %cst_48 = arith.constant 0.000000e+00 : f32
    %180 = vector.broadcast %cst_48 : f32 to vector<2x16xf32>
    %181 = arith.maximumf %179, %180 : vector<2x16xf32>
    %182 = tpu.concatenate %169, %181 in 1 : vector<2x32xf32>, vector<2x16xf32> -> vector<2x48xf32>
    %c0_49 = arith.constant 0 : index
    %c0_50 = arith.constant 0 : index
    %183 = vector.load %arg8[%c0_49, %c0_50] : memref<48x16xf32, #tpu.memory_space<vmem>>, vector<48x16xf32>
    %cst_51 = arith.constant dense<0.000000e+00> : vector<2x16xf32>
    %184 = tpu.matmul %182, %183, %cst_51 {dimension_numbers = #tpu.dot_dimension_numbers<[1], [0], [0], [1], [0, 0, 1, 1], [], []>} : vector<2x48xf32>, vector<48x16xf32>, vector<2x16xf32> -> vector<2x16xf32>
    %185 = vector.broadcast %21 : vector<1x16xf32> to vector<2x16xf32>
    %186 = arith.addf %184, %185 : vector<2x16xf32>
    %cst_52 = arith.constant dense<0.000000e+00> : vector<2xf32>
    %187 = vector.multi_reduction <add>, %186, %cst_52 [1] : vector<2x16xf32> to vector<2xf32>
    %188 = vector.shape_cast %187 : vector<2xf32> to vector<2x1xf32>
    %cst_53 = arith.constant 1.600000e+01 : f32
    %189 = vector.broadcast %cst_53 : f32 to vector<2x1xf32>
    %190 = arith.divf %188, %189 : vector<2x1xf32>
    %191 = vector.broadcast %190 : vector<2x1xf32> to vector<2x16xf32>
    %192 = arith.subf %186, %191 : vector<2x16xf32>
    %193 = arith.mulf %192, %192 : vector<2x16xf32>
    %cst_54 = arith.constant dense<0.000000e+00> : vector<2xf32>
    %194 = vector.multi_reduction <add>, %193, %cst_54 [1] : vector<2x16xf32> to vector<2xf32>
    %195 = vector.shape_cast %194 : vector<2xf32> to vector<2x1xf32>
    %cst_55 = arith.constant 1.600000e+01 : f32
    %196 = vector.broadcast %cst_55 : f32 to vector<2x1xf32>
    %197 = arith.divf %195, %196 : vector<2x1xf32>
    %198 = vector.broadcast %190 : vector<2x1xf32> to vector<2x16xf32>
    %199 = arith.subf %186, %198 : vector<2x16xf32>
    %cst_56 = arith.constant 9.99999974E-6 : f32
    %200 = vector.broadcast %cst_56 : f32 to vector<2x1xf32>
    %201 = arith.addf %197, %200 : vector<2x1xf32>
    %202 = math.rsqrt %201 : vector<2x1xf32>
    %203 = vector.broadcast %202 : vector<2x1xf32> to vector<2x16xf32>
    %204 = arith.mulf %199, %203 : vector<2x16xf32>
    %205 = vector.broadcast %22 : vector<1x16xf32> to vector<2x16xf32>
    %206 = arith.mulf %204, %205 : vector<2x16xf32>
    %207 = vector.broadcast %23 : vector<1x16xf32> to vector<2x16xf32>
    %208 = arith.addf %206, %207 : vector<2x16xf32>
    %c0_57 = arith.constant 0 : index
    %c0_58 = arith.constant 0 : index
    %209 = vector.load %arg9[%c0_57, %c0_58] : memref<2x16xf32, #tpu.memory_space<vmem>>, vector<2x16xf32>
    tpu.vector_store %arg9[%c0_57, %c0_58], %208 {strides = array<i32>} : memref<2x16xf32, #tpu.memory_space<vmem>>, vector<2x16xf32>,
    return
  }
}

</mosaic_0001>

<llo_original>
// kernel: code_similarity_forward.1
$region0: #{code_similarity_forward.1}
  #allocation0 [shape = 'u32[]', space=smem, size = 0x4, offset = 0x4, fixed_abs, tag = 'smem constant byte address 0x4 - core index']
  #allocation1 [shape = 'u32[144,128]{1,0:T(1,128)}', space=vmem, size = 0x12000, scoped, tag = 'internal scratch']
  %s0 = inlined_call_operand.vmem [shape: f32[16,64], index: 0, kind: input, shape index: {}]
  %s1 = inlined_call_operand.vmem [shape: f32[24,64], index: 1, kind: input, shape index: {}]
  %s2 = inlined_call_operand.vmem [shape: s32[24,1], index: 2, kind: input, shape index: {}]
  %s3 = inlined_call_operand.vmem [shape: s32[16,1], index: 3, kind: input, shape index: {}]
  %s4 = inlined_call_operand.vmem [shape: s32[3,24], index: 4, kind: input, shape index: {}]
  %s5 = inlined_call_operand.vmem [shape: f32[15,32], index: 5, kind: input, shape index: {}]
  %s6 = inlined_call_operand.vmem [shape: f32[224,32], index: 6, kind: input, shape index: {}]
  %s7 = inlined_call_operand.vmem [shape: f32[96,16], index: 7, kind: input, shape index: {}]
  %s8 = inlined_call_operand.vmem [shape: f32[48,16], index: 8, kind: input, shape index: {}]
  %s9 = inlined_call_operand.hbm [shape: f32[2,16], index: 9, kind: output, shape index: {}]
  %s10 = sld [smem:[#allocation0]]
  $region46: #{code_similarity_forward.1} parent=0
    _
  %s12 = ssub.s32 1, %s10
  %s13 = scalar_select 0, %s12, %s10
  $region1: #{code_similarity_forward.1} parent=0
    #allocation2 [shape = 'u8[1024]{0}', space=vmem, size = 0x400, scoped, tag = 'output window, operand 0, single buffered']
    #allocation3 [shape = 's32[1]{0}', space=sflag, size = 0x4, scoped, tag = 'scoped memory for code_similarity_forward.1']
    %14 = vsyncpa [#allocation3], 0
    // Predicated region
    $region2: #{code_similarity_forward.1} parent=1 // pred_check
      _
    $region3: #{code_similarity_forward.1} parent=1 // pred_check_branch
      %16 = sbr.rel (0) target = $region5
    $region4: #{code_similarity_forward.1} parent=1 // pred_region
      _
    $region5: #{code_similarity_forward.1} parent=1 // pred_fallthru
      _
    // Predicated region
    $region6: #{code_similarity_forward.1} parent=1 // pred_check
      _
    $region7: #{code_similarity_forward.1} parent=1 // pred_check_branch
      %18 = sbr.rel (0) target = $region9
    $region8: #{code_similarity_forward.1} parent=1 // pred_region
      _
    $region9: #{code_similarity_forward.1} parent=1 // pred_fallthru
      _
    // Predicated region
    $region10: #{code_similarity_forward.1} parent=1 // pred_check
      _
    $region11: #{code_similarity_forward.1} parent=1 // pred_check_branch
      %20 = sbr.rel (0) target = $region13
    $region12: #{code_similarity_forward.1} parent=1 // pred_region
      _
    $region13: #{code_similarity_forward.1} parent=1 // pred_fallthru
      _
    // Predicated region
    $region14: #{code_similarity_forward.1} parent=1 // pred_check
      _
    $region15: #{code_similarity_forward.1} parent=1 // pred_check_branch
      %22 = sbr.rel (0) target = $region17
    $region16: #{code_similarity_forward.1} parent=1 // pred_region
      _
    $region17: #{code_similarity_forward.1} parent=1 // pred_fallthru
      _
    // Predicated region
    $region18: #{code_similarity_forward.1} parent=1 // pred_check
      _
    $region19: #{code_similarity_forward.1} parent=1 // pred_check_branch
      %24 = sbr.rel (0) target = $region21
    $region20: #{code_similarity_forward.1} parent=1 // pred_region
      _
    $region21: #{code_similarity_forward.1} parent=1 // pred_fallthru
      _
    // Predicated region
    $region22: #{code_similarity_forward.1} parent=1 // pred_check
      _
    $region23: #{code_similarity_forward.1} parent=1 // pred_check_branch
      %26 = sbr.rel (0) target = $region25
    $region24: #{code_similarity_forward.1} parent=1 // pred_region
      _
    $region25: #{code_similarity_forward.1} parent=1 // pred_fallthru
      _
    // Predicated region
    $region26: #{code_similarity_forward.1} parent=1 // pred_check
      _
    $region27: #{code_similarity_forward.1} parent=1 // pred_check_branch
      %28 = sbr.rel (0) target = $region29
    $region28: #{code_similarity_forward.1} parent=1 // pred_region
      _
    $region29: #{code_similarity_forward.1} parent=1 // pred_fallthru
      _
    // Predicated region
    $region30: #{code_similarity_forward.1} parent=1 // pred_check
      _
    $region31: #{code_similarity_forward.1} parent=1 // pred_check_branch
      %30 = sbr.rel (0) target = $region33
    $region32: #{code_similarity_forward.1} parent=1 // pred_region
      _
    $region33: #{code_similarity_forward.1} parent=1 // pred_fallthru
      _
    // Predicated region
    $region34: #{code_similarity_forward.1} parent=1 // pred_check
      _
    $region35: #{code_similarity_forward.1} parent=1 // pred_check_branch
      %32 = sbr.rel (0) target = $region37
    $region36: #{code_similarity_forward.1} parent=1 // pred_region
      _
    $region37: #{code_similarity_forward.1} parent=1 // pred_fallthru
      _
    %v34 = vld [vmem:[%s6] sm:$0xff]
    %v35 = vld [vmem:[%s6 + $0x8] sm:$0xff]
    %v36 = vld [vmem:[%s6 + $0x10] sm:$0xff]
    %v37 = vld [vmem:[%s6 + $0x18] sm:$0xff]
    %v38 = vld [vmem:[%s6 + $0x20] sm:$0xff]
    %v39 = vld [vmem:[%s6 + $0x28] sm:$0xff]
    %v40 = vld [vmem:[%s6 + $0x30] sm:$0xff]
    %v41 = vld [vmem:[%s6 + $0x38] sm:$0xff]
    %v42 = vld [vmem:[%s6 + $0x40] sm:$0xff]
    %v43 = vld [vmem:[%s6 + $0x48] sm:$0xff]
    %v44 = vld [vmem:[%s6 + $0x50] sm:$0xff]
    %v45 = vld [vmem:[%s6 + $0x58] sm:$0xff]
    %v46 = vld [vmem:[%s6 + $0x60] sm:$0xff]
    %v47 = vld [vmem:[%s6 + $0x68] sm:$0xff]
    %v48 = vld [vmem:[%s6 + $0x70] sm:$0xff]
    %v49 = vld [vmem:[%s6 + $0x78] sm:$0xff]
    %v50 = vld [vmem:[%s6 + $0x80] sm:$0xff]
    %v51 = vld [vmem:[%s6 + $0x88] sm:$0xff]
    %v52 = vld [vmem:[%s6 + $0x90] sm:$0xff]
    %v53 = vld [vmem:[%s6 + $0x98] sm:$0xff]
    %v54 = vld [vmem:[%s6 + $0xa0] sm:$0xff]
    %v55 = vld [vmem:[%s6 + $0xa8] sm:$0xff]
    %v56 = vld [vmem:[%s6 + $0xb0] sm:$0xff]
    %v57 = vld [vmem:[%s6 + $0xb8] sm:$0xff]
    %v58 = vld [vmem:[%s6 + $0xc0] sm:$0xff]
    %v59 = vld [vmem:[%s6 + $0xc8] sm:$0xff]
    %v60 = vld [vmem:[%s6 + $0xd0] sm:$0xff]
    %v61 = vld [vmem:[%s6 + $0xd8] sm:$0xff]
    %v62 = vld [vmem:[%s7] sm:$0xff]
    %v63 = vld [vmem:[%s7 + $0x8] sm:$0xff]
    %v64 = vld [vmem:[%s7 + $0x10] sm:$0xff]
    %v65 = vld [vmem:[%s7 + $0x18] sm:$0xff]
    %v66 = vld [vmem:[%s7 + $0x20] sm:$0xff]
    %v67 = vld [vmem:[%s7 + $0x28] sm:$0xff]
    %v68 = vld [vmem:[%s7 + $0x30] sm:$0xff]
    %v69 = vld [vmem:[%s7 + $0x38] sm:$0xff]
    %v70 = vld [vmem:[%s7 + $0x40] sm:$0xff]
    %v71 = vld [vmem:[%s7 + $0x48] sm:$0xff]
    %v72 = vld [vmem:[%s7 + $0x50] sm:$0xff]
    %v73 = vld [vmem:[%s7 + $0x58] sm:$0xff]
    %v74 = vld [vmem:[%s5] sm:$0xff]
    %v75 = vld [vmem:[%s5 + $0x8] sm:$0x7f]
    %v76 = vld [vmem:[%s4] sm:$0x1]
    %v77 = vld [vmem:[%s4 + $0x1] sm:$0x1]
    %v78 = vld [vmem:[%s4 + $0x2] sm:$0x1]
    %v79 = vld [vmem:[%s3] sm:$0xff]
    %v80 = vld [vmem:[%s3 + $0x8] sm:$0xff]
    %v81 = vld [vmem:[%s0] sm:$0xff]
    %v82 = vld [vmem:[%s0 + $0x8] sm:$0xff]
    %v83 = vlaneseq
    %v84 = vshrl.u32 %v83, 7
    %v85 = vsub.s32 0, %v84
    %v86 = vrot.slane %v74, %v85
    %vm87 = vcmask 523264
    %v89 = vsel %vm87, %v81, 0
    %v92 = vsel %vm87, %v82, 0
    %94 = vmatprep.subr.mxu0 0.0
    %95 = vmatpush1.msra.mxu0 %v34
    %96 = vmatprep.subr.mxu0 0.0
    %97 = vmatpush1.msra.mxu0 %v35
    %98 = vmatprep.subr.mxu0 0.0
    %99 = vmatpush1.msra.mxu0 %v36
    %100 = vmatprep.subr.mxu0 0.0
    %101 = vmatpush1.msra.mxu0 %v37
    %102 = vmatprep.subr.mxu0 0.0
    %103 = vmatpush1.msra.mxu0 %v38
    %104 = vmatprep.subr.mxu0 0.0
    %105 = vmatpush1.msra.mxu0 %v39
    %106 = vmatprep.subr.mxu0 0.0
    %107 = vmatpush1.msra.mxu0 %v40
    %108 = vmatprep.subr.mxu0 0.0
    %109 = vmatpush1.msra.mxu0 %v41
    %110 = vmatprep.subr.mxu0 0.0
    %111 = vmatpush1.msra.mxu0 0.0
    %112 = vmatprep.subr.mxu0 0.0
    %113 = vmatpush1.msra.mxu0 0.0
    %114 = vmatprep.subr.mxu0 0.0
    %115 = vmatpush1.msra.mxu0 0.0
    %116 = vmatprep.subr.mxu0 0.0
    %117 = vmatpush1.msra.mxu0 0.0
    %118 = vmatprep.subr.mxu0 0.0
    %119 = vmatpush1.msra.mxu0 0.0
    %120 = vmatprep.subr.mxu0 0.0
    %121 = vmatpush1.msra.mxu0 0.0
    %122 = vmatprep.subr.mxu0 0.0
    %123 = vmatpush1.msra.mxu0 0.0
    %124 = vmatprep.subr.mxu0 0.0
    %125 = vmatpush1.msra.mxu0 0.0
    %126 = vmatprep.subr.mxu0 0.0
    %127 = vmatpush1.msra.mxu0 0.0
    %128 = vmatprep.subr.mxu0 0.0
    %129 = vmatpush1.msra.mxu0 0.0
    %130 = vmatprep.subr.mxu0 0.0
    %131 = vmatpush1.msra.mxu0 0.0
    %132 = vmatprep.subr.mxu0 0.0
    %133 = vmatpush1.msra.mxu0 0.0
    %134 = vmatprep.subr.mxu0 0.0
    %135 = vmatpush1.msra.mxu0 0.0
    %136 = vmatprep.subr.mxu0 0.0
    %137 = vmatpush1.msra.mxu0 0.0
    %138 = vmatprep.subr.mxu0 0.0
    %139 = vmatpush1.msra.mxu0 0.0
    %140 = vmatprep.subr.mxu0 0.0
    %141 = vmatpush1.msra.mxu0 0.0
    %142 = vmatprep.subr.mxu0 0.0
    %143 = vmatpush1.msra.mxu0 0.0
    %144 = vmatprep.subr.mxu0 0.0
    %145 = vmatpush1.msra.mxu0 0.0
    %146 = vmatprep.subr.mxu0 0.0
    %147 = vmatpush1.msra.mxu0 0.0
    %148 = vmatprep.subr.mxu0 0.0
    %149 = vmatpush1.msra.mxu0 0.0
    %150 = vmatprep.subr.mxu0 0.0
    %151 = vmatpush1.msra.mxu0 0.0
    %152 = vmatprep.subr.mxu0 0.0
    %153 = vmatpush1.msra.mxu0 0.0
    %154 = vmatprep.subr.mxu0 0.0
    %155 = vmatpush1.msra.mxu0 0.0
    %156 = vmatprep.subr.mxu0 0.0
    %157 = vmatpush1.msra.mxu0 0.0
    %158 = vmatprep.mubr.f32.mxu0 0.0
    %159 = vmatmul.mubr.f32.gmra.mrb[0].mxu0 %v89
    %v160 = vpop.f32.mrb[0].mxu0
    %v161 = vadd.f32 %v86, %v160
    %v162 = vpop.f32.mrb[0].mxu0
    %163 = vmatprep.mubr.f32.mxu0 0.0
    %164 = vmatmul.mubr.f32.gmra.mrb[0].mxu0 %v92
    %v165 = vpop.f32.mrb[0].mxu0
    %v166 = vadd.f32 %v86, %v165
    %v167 = vpop.f32.mrb[0].mxu0
    %168 = vdwg.mxu0
    %v169 = vpack.c.bf16 %v166, %v161
    %v170 = vld [vmem:[%s2] sm:$0xff]
    %v171 = vld [vmem:[%s2 + $0x8] sm:$0xff]
    %v172 = vld [vmem:[%s2 + $0x10] sm:$0xff]
    %v173 = vlaneseq
    %v174 = vand.u32 %v173, 127
    %175 = vset.pattern.permute.xlu0 0
    %176 = vperm.xlu0 %175, %v170
    %v177 = vpop.permute.xlu0 %176
    %178 = vset.pattern.permute.xlu0 0
    %179 = vperm.xlu0 %178, %v171
    %v180 = vpop.permute.xlu0 %179
    %181 = vset.pattern.permute.xlu0 0
    %182 = vperm.xlu0 %181, %v172
    %v183 = vpop.permute.xlu0 %182
    %vm184 = vcmp.eq.s32.totalorder %v177, %v174
    %vm185 = vcmp.eq.s32.totalorder %v180, %v174
    %vm186 = vcmp.eq.s32.totalorder %v183, %v174
    %v187 = vsel %vm184, 1, 0
    %v188 = vsel %vm185, 1, 0
    %v189 = vsel %vm186, 1, 0
    %v190 = vcvt.s32.f32 %v187
    %v191 = vcvt.s32.f32 %v188
    %v192 = vcvt.s32.f32 %v189
    %v193 = vpack.c.bf16 %v191, %v190
    %v194 = vpack.c.bf16 %v192, %v192
    %v195 = vlaneseq
    %v196 = vshrl.u32 %v195, 7
    %v197 = vadd.s32 %v196, 8
    %v198 = vlaneseq
    %v199 = vshrl.u32 %v198, 7
    %v200 = vsub.s32 0, %v199
    %v201 = vrot.slane %v76, %v200
    %vm202 = vcmp.eq.s32.totalorder %v201, %v196
    %vm203 = vcmp.eq.s32.totalorder %v201, %v197
    %v204 = vsel %vm202, 1, 0
    %v205 = vsel %vm203, 1, 0
    %v206 = vcvt.s32.f32 %v204
    %v207 = vcvt.s32.f32 %v205
    %v208 = vpack.c.bf16 %v207, %v206
    %vm209 = vcmask 130048
    %v211 = vsel %vm209, %v193, 0
    %v214 = vsel %vm209, %v194, 0
    %216 = vmatprep.subr.bf16.mxu0 0
    %217 = vmatpush1.bf16.msra.mxu0 %v169
    %218 = vmatprep.subr.bf16.mxu0 0
    %219 = vmatpush1.bf16.msra.mxu0 0
    %220 = vmatprep.subr.bf16.mxu0 0
    %221 = vmatpush1.bf16.msra.mxu0 0
    %222 = vmatprep.subr.bf16.mxu0 0
    %223 = vmatpush1.bf16.msra.mxu0 0
    %224 = vmatprep.subr.bf16.mxu0 0
    %225 = vmatpush1.bf16.msra.mxu0 0
    %226 = vmatprep.subr.bf16.mxu0 0
    %227 = vmatpush1.bf16.msra.mxu0 0
    %228 = vmatprep.subr.bf16.mxu0 0
    %229 = vmatpush1.bf16.msra.mxu0 0
    %230 = vmatprep.subr.bf16.mxu0 0
    %231 = vmatpush1.bf16.msra.mxu0 0
    %232 = vmatprep.subr.bf16.mxu0 0
    %233 = vmatpush1.bf16.msra.mxu0 0
    %234 = vmatprep.subr.bf16.mxu0 0
    %235 = vmatpush1.bf16.msra.mxu0 0
    %236 = vmatprep.subr.bf16.mxu0 0
    %237 = vmatpush1.bf16.msra.mxu0 0
    %238 = vmatprep.subr.bf16.mxu0 0
    %239 = vmatpush1.bf16.msra.mxu0 0
    %240 = vmatprep.subr.bf16.mxu0 0
    %241 = vmatpush1.bf16.msra.mxu0 0
    %242 = vmatprep.subr.bf16.mxu0 0
    %243 = vmatpush1.bf16.msra.mxu0 0
    %244 = vmatprep.subr.bf16.mxu0 0
    %245 = vmatpush1.bf16.msra.mxu0 0
    %246 = vmatprep.subr.bf16.mxu0 0
    %247 = vmatpush1.bf16.msra.mxu0 0
    %248 = vmatprep.mubr.bf16.mxu0 0
    %249 = vmatmul.mubr.bf16.gmra.mrb[0].mxu0 %v211
    %v250 = vpop.f32.mrb[0].mxu0
    %v251 = vadd.f32 0.0, %v250
    %v252 = vpop.f32.mrb[0].mxu0
    %v253 = vpop.f32.mrb[0].mxu0
    %v254 = vadd.f32 0.0, %v253
    %v255 = vpop.f32.mrb[0].mxu0
    %256 = vmatprep.mubr.bf16.mxu0 0
    %257 = vmatmul.mubr.bf16.gmra.mrb[0].mxu0 %v214
    %v258 = vpop.f32.mrb[0].mxu0
    %v259 = vadd.f32 0.0, %v258
    %v260 = vpop.f32.mrb[0].mxu0
    %v261 = vpop.f32.mrb[0].mxu0
    %v262 = vpop.f32.mrb[0].mxu0
    %263 = vdwg.mxu0
    %v264 = vpack.c.bf16 %v254, %v251
    %v265 = vpack.c.bf16 %v259, %v259
    %vm266 = vcmask 195584
    %v268 = vsel %vm266, %v208, 0
    %vm270 = vcmask 1043456
    %v272 = vsel %vm270, %v265, 0
    %274 = vmatprep.subr.bf16.mxu0 0
    %275 = vmatpush1.bf16.msra.mxu0 %v264
    %276 = vmatprep.subr.bf16.mxu0 0
    %277 = vmatpush1.bf16.msra.mxu0 %v272
    %278 = vmatprep.subr.bf16.mxu0 0
    %279 = vmatpush1.bf16.msra.mxu0 0
    %280 = vmatprep.subr.bf16.mxu0 0
    %281 = vmatpush1.bf16.msra.mxu0 0
    %282 = vmatprep.subr.bf16.mxu0 0
    %283 = vmatpush1.bf16.msra.mxu0 0
    %284 = vmatprep.subr.bf16.mxu0 0
    %285 = vmatpush1.bf16.msra.mxu0 0
    %286 = vmatprep.subr.bf16.mxu0 0
    %287 = vmatpush1.bf16.msra.mxu0 0
    %288 = vmatprep.subr.bf16.mxu0 0
    %289 = vmatpush1.bf16.msra.mxu0 0
    %290 = vmatprep.subr.bf16.mxu0 0
    %291 = vmatpush1.bf16.msra.mxu0 0
    %292 = vmatprep.subr.bf16.mxu0 0
    %293 = vmatpush1.bf16.msra.mxu0 0
    %294 = vmatprep.subr.bf16.mxu0 0
    %295 = vmatpush1.bf16.msra.mxu0 0
    %296 = vmatprep.subr.bf16.mxu0 0
    %297 = vmatpush1.bf16.msra.mxu0 0
    %298 = vmatprep.subr.bf16.mxu0 0
    %299 = vmatpush1.bf16.msra.mxu0 0
    %300 = vmatprep.subr.bf16.mxu0 0
    %301 = vmatpush1.bf16.msra.mxu0 0
    %302 = vmatprep.subr.bf16.mxu0 0
    %303 = vmatpush1.bf16.msra.mxu0 0
    %304 = vmatprep.subr.bf16.mxu0 0
    %305 = vmatpush1.bf16.msra.mxu0 0
    %306 = vmatprep.mubr.bf16.mxu0 0
    %307 = vmatmul.mubr.bf16.gmra.mrb[0].mxu0 %v268
    %v308 = vpop.f32.mrb[0].mxu0
    %v309 = vadd.f32 %v161, %v308
    %v310 = vpop.f32.mrb[0].mxu0
    %v311 = vpop.f32.mrb[0].mxu0
    %v312 = vadd.f32 %v166, %v311
    %v313 = vpop.f32.mrb[0].mxu0
    %314 = vdwg.mxu0
    %317 = vrot.lane.b32.xlu0 %v309, 32
    %v318 = vpop.permute.xlu0 %317
    %319 = vrot.lane.b32.xlu0 %v312, 32
    %v320 = vpop.permute.xlu0 %319
    %vm323 = vcmask 261120
    %v324 = vsel %vm323, %v161, %v318
    %v325 = vsel %vm323, %v166, %v320
    %v326 = vlaneseq
    %v327 = vshrl.u32 %v326, 7
    %v328 = vsub.s32 1, %v327
    %v329 = vrot.slane %v74, %v328
    %v331 = vsel %vm87, %v324, 0
    %v334 = vsel %vm87, %v325, 0
    %336 = vmatprep.subr.mxu0 0.0
    %337 = vmatpush1.msra.mxu0 %v42
    %338 = vmatprep.subr.mxu0 0.0
    %339 = vmatpush1.msra.mxu0 %v43
    %340 = vmatprep.subr.mxu0 0.0
    %341 = vmatpush1.msra.mxu0 %v44
    %342 = vmatprep.subr.mxu0 0.0
    %343 = vmatpush1.msra.mxu0 %v45
    %344 = vmatprep.subr.mxu0 0.0
    %345 = vmatpush1.msra.mxu0 %v46
    %346 = vmatprep.subr.mxu0 0.0
    %347 = vmatpush1.msra.mxu0 %v47
    %348 = vmatprep.subr.mxu0 0.0
    %349 = vmatpush1.msra.mxu0 %v48
    %350 = vmatprep.subr.mxu0 0.0
    %351 = vmatpush1.msra.mxu0 %v49
    %352 = vmatprep.subr.mxu0 0.0
    %353 = vmatpush1.msra.mxu0 0.0
    %354 = vmatprep.subr.mxu0 0.0
    %355 = vmatpush1.msra.mxu0 0.0
    %356 = vmatprep.subr.mxu0 0.0
    %357 = vmatpush1.msra.mxu0 0.0
    %358 = vmatprep.subr.mxu0 0.0
    %359 = vmatpush1.msra.mxu0 0.0
    %360 = vmatprep.subr.mxu0 0.0
    %361 = vmatpush1.msra.mxu0 0.0
    %362 = vmatprep.subr.mxu0 0.0
    %363 = vmatpush1.msra.mxu0 0.0
    %364 = vmatprep.subr.mxu0 0.0
    %365 = vmatpush1.msra.mxu0 0.0
    %366 = vmatprep.subr.mxu0 0.0
    %367 = vmatpush1.msra.mxu0 0.0
    %368 = vmatprep.subr.mxu0 0.0
    %369 = vmatpush1.msra.mxu0 0.0
    %370 = vmatprep.subr.mxu0 0.0
    %371 = vmatpush1.msra.mxu0 0.0
    %372 = vmatprep.subr.mxu0 0.0
    %373 = vmatpush1.msra.mxu0 0.0
    %374 = vmatprep.subr.mxu0 0.0
    %375 = vmatpush1.msra.mxu0 0.0
    %376 = vmatprep.subr.mxu0 0.0
    %377 = vmatpush1.msra.mxu0 0.0
    %378 = vmatprep.subr.mxu0 0.0
    %379 = vmatpush1.msra.mxu0 0.0
    %380 = vmatprep.subr.mxu0 0.0
    %381 = vmatpush1.msra.mxu0 0.0
    %382 = vmatprep.subr.mxu0 0.0
    %383 = vmatpush1.msra.mxu0 0.0
    %384 = vmatprep.subr.mxu0 0.0
    %385 = vmatpush1.msra.mxu0 0.0
    %386 = vmatprep.subr.mxu0 0.0
    %387 = vmatpush1.msra.mxu0 0.0
    %388 = vmatprep.subr.mxu0 0.0
    %389 = vmatpush1.msra.mxu0 0.0
    %390 = vmatprep.subr.mxu0 0.0
    %391 = vmatpush1.msra.mxu0 0.0
    %392 = vmatprep.subr.mxu0 0.0
    %393 = vmatpush1.msra.mxu0 0.0
    %394 = vmatprep.subr.mxu0 0.0
    %395 = vmatpush1.msra.mxu0 0.0
    %396 = vmatprep.subr.mxu0 0.0
    %397 = vmatpush1.msra.mxu0 0.0
    %398 = vmatprep.subr.mxu0 0.0
    %399 = vmatpush1.msra.mxu0 0.0
    %400 = vmatprep.mubr.f32.mxu0 0.0
    %401 = vmatmul.mubr.f32.gmra.mrb[0].mxu0 %v331
    %v402 = vpop.f32.mrb[0].mxu0
    %v403 = vadd.f32 %v329, %v402
    %v404 = vpop.f32.mrb[0].mxu0
    %405 = vmatprep.mubr.f32.mxu0 0.0
    %406 = vmatmul.mubr.f32.gmra.mrb[0].mxu0 %v334
    %v407 = vpop.f32.mrb[0].mxu0
    %v408 = vadd.f32 %v329, %v407
    %v409 = vpop.f32.mrb[0].mxu0
    %410 = vdwg.mxu0
    %v411 = vmax.f32 %v403, 0.0
    %v412 = vmax.f32 %v408, 0.0
    %v413 = vsel %vm323, %v411, 0.0
    %414 = vadd.xlane.f32.xlu0 %v413
    %v415 = vpop.xlane.xlu0 %414
    %v416 = vsel %vm323, %v412, 0.0
    %417 = vadd.xlane.f32.xlu0 %v416
    %v418 = vpop.xlane.xlu0 %417
    %v419 = vrcp.pop 32.0
    %v420 = vmul.f32 %v415, %v419
    %v421 = vmul.f32 %v418, %v419
    %v422 = vsub.f32 %v411, %v420
    %v423 = vsub.f32 %v412, %v421
    %v424 = vmul.f32 %v422, %v422
    %v425 = vmul.f32 %v423, %v423
    %v426 = vsel %vm323, %v424, 0.0
    %427 = vadd.xlane.f32.xlu0 %v426
    %v428 = vpop.xlane.xlu0 %427
    %v429 = vsel %vm323, %v425, 0.0
    %430 = vadd.xlane.f32.xlu0 %v429
    %v431 = vpop.xlane.xlu0 %430
    %v432 = vmul.f32 %v428, %v419
    %v433 = vmul.f32 %v431, %v419
    %v434 = vadd.f32 %v432, 1e-05
    %v435 = vadd.f32 %v433, 1e-05
    %v436 = vrsqrt.pop %v434
    %v437 = vrsqrt.pop %v435
    %v438 = vmul.f32 %v422, %v436
    %v439 = vmul.f32 %v423, %v437
    %v440 = vlaneseq
    %v441 = vshrl.u32 %v440, 7
    %v442 = vsub.s32 2, %v441
    %v443 = vrot.slane %v74, %v442
    %v444 = vmul.f32 %v438, %v443
    %v445 = vmul.f32 %v439, %v443
    %v446 = vlaneseq
    %v447 = vshrl.u32 %v446, 7
    %v448 = vsub.s32 3, %v447
    %v449 = vrot.slane %v74, %v448
    %v450 = vadd.f32 %v444, %v449
    %v451 = vadd.f32 %v445, %v449
    %v452 = vlaneseq
    %v453 = vshrl.u32 %v452, 7
    %v454 = vsub.s32 4, %v453
    %v455 = vrot.slane %v74, %v454
    %v457 = vsel %vm323, %v450, 0
    %v460 = vsel %vm323, %v451, 0
    %462 = vmatprep.subr.mxu0 0.0
    %463 = vmatpush1.msra.mxu0 %v50
    %464 = vmatprep.subr.mxu0 0.0
    %465 = vmatpush1.msra.mxu0 %v51
    %466 = vmatprep.subr.mxu0 0.0
    %467 = vmatpush1.msra.mxu0 %v52
    %468 = vmatprep.subr.mxu0 0.0
    %469 = vmatpush1.msra.mxu0 %v53
    %470 = vmatprep.subr.mxu0 0.0
    %471 = vmatpush1.msra.mxu0 0.0
    %472 = vmatprep.subr.mxu0 0.0
    %473 = vmatpush1.msra.mxu0 0.0
    %474 = vmatprep.subr.mxu0 0.0
    %475 = vmatpush1.msra.mxu0 0.0
    %476 = vmatprep.subr.mxu0 0.0
    %477 = vmatpush1.msra.mxu0 0.0
    %478 = vmatprep.subr.mxu0 0.0
    %479 = vmatpush1.msra.mxu0 0.0
    %480 = vmatprep.subr.mxu0 0.0
    %481 = vmatpush1.msra.mxu0 0.0
    %482 = vmatprep.subr.mxu0 0.0
    %483 = vmatpush1.msra.mxu0 0.0
    %484 = vmatprep.subr.mxu0 0.0
    %485 = vmatpush1.msra.mxu0 0.0
    %486 = vmatprep.subr.mxu0 0.0
    %487 = vmatpush1.msra.mxu0 0.0
    %488 = vmatprep.subr.mxu0 0.0
    %489 = vmatpush1.msra.mxu0 0.0
    %490 = vmatprep.subr.mxu0 0.0
    %491 = vmatpush1.msra.mxu0 0.0
    %492 = vmatprep.subr.mxu0 0.0
    %493 = vmatpush1.msra.mxu0 0.0
    %494 = vmatprep.subr.mxu0 0.0
    %495 = vmatpush1.msra.mxu0 0.0
    %496 = vmatprep.subr.mxu0 0.0
    %497 = vmatpush1.msra.mxu0 0.0
    %498 = vmatprep.subr.mxu0 0.0
    %499 = vmatpush1.msra.mxu0 0.0
    %500 = vmatprep.subr.mxu0 0.0
    %501 = vmatpush1.msra.mxu0 0.0
    %502 = vmatprep.subr.mxu0 0.0
    %503 = vmatpush1.msra.mxu0 0.0
    %504 = vmatprep.subr.mxu0 0.0
    %505 = vmatpush1.msra.mxu0 0.0
    %506 = vmatprep.subr.mxu0 0.0
    %507 = vmatpush1.msra.mxu0 0.0
    %508 = vmatprep.subr.mxu0 0.0
    %509 = vmatpush1.msra.mxu0 0.0
    %510 = vmatprep.subr.mxu0 0.0
    %511 = vmatpush1.msra.mxu0 0.0
    %512 = vmatprep.subr.mxu0 0.0
    %513 = vmatpush1.msra.mxu0 0.0
    %514 = vmatprep.subr.mxu0 0.0
    %515 = vmatpush1.msra.mxu0 0.0
    %516 = vmatprep.subr.mxu0 0.0
    %517 = vmatpush1.msra.mxu0 0.0
    %518 = vmatprep.subr.mxu0 0.0
    %519 = vmatpush1.msra.mxu0 0.0
    %520 = vmatprep.subr.mxu0 0.0
    %521 = vmatpush1.msra.mxu0 0.0
    %522 = vmatprep.subr.mxu0 0.0
    %523 = vmatpush1.msra.mxu0 0.0
    %524 = vmatprep.subr.mxu0 0.0
    %525 = vmatpush1.msra.mxu0 0.0
    %526 = vmatprep.mubr.f32.mxu0 0.0
    %527 = vmatmul.mubr.f32.gmra.mrb[0].mxu0 %v457
    %v528 = vpop.f32.mrb[0].mxu0
    %v529 = vadd.f32 %v455, %v528
    %v530 = vpop.f32.mrb[0].mxu0
    %531 = vmatprep.mubr.f32.mxu0 0.0
    %532 = vmatmul.mubr.f32.gmra.mrb[0].mxu0 %v460
    %v533 = vpop.f32.mrb[0].mxu0
    %v534 = vadd.f32 %v455, %v533
    %v535 = vpop.f32.mrb[0].mxu0
    %536 = vdwg.mxu0
    %v537 = vpack.c.bf16 %v534, %v529
    %538 = vmatprep.subr.bf16.mxu0 0
    %539 = vmatpush1.bf16.msra.mxu0 %v537
    %540 = vmatprep.subr.bf16.mxu0 0
    %541 = vmatpush1.bf16.msra.mxu0 0
    %542 = vmatprep.subr.bf16.mxu0 0
    %543 = vmatpush1.bf16.msra.mxu0 0
    %544 = vmatprep.subr.bf16.mxu0 0
    %545 = vmatpush1.bf16.msra.mxu0 0
    %546 = vmatprep.subr.bf16.mxu0 0
    %547 = vmatpush1.bf16.msra.mxu0 0
    %548 = vmatprep.subr.bf16.mxu0 0
    %549 = vmatpush1.bf16.msra.mxu0 0
    %550 = vmatprep.subr.bf16.mxu0 0
    %551 = vmatpush1.bf16.msra.mxu0 0
    %552 = vmatprep.subr.bf16.mxu0 0
    %553 = vmatpush1.bf16.msra.mxu0 0
    %554 = vmatprep.subr.bf16.mxu0 0
    %555 = vmatpush1.bf16.msra.mxu0 0
    %556 = vmatprep.subr.bf16.mxu0 0
    %557 = vmatpush1.bf16.msra.mxu0 0
    %558 = vmatprep.subr.bf16.mxu0 0
    %559 = vmatpush1.bf16.msra.mxu0 0
    %560 = vmatprep.subr.bf16.mxu0 0
    %561 = vmatpush1.bf16.msra.mxu0 0
    %562 = vmatprep.subr.bf16.mxu0 0
    %563 = vmatpush1.bf16.msra.mxu0 0
    %564 = vmatprep.subr.bf16.mxu0 0
    %565 = vmatpush1.bf16.msra.mxu0 0
    %566 = vmatprep.subr.bf16.mxu0 0
    %567 = vmatpush1.bf16.msra.mxu0 0
    %568 = vmatprep.subr.bf16.mxu0 0
    %569 = vmatpush1.bf16.msra.mxu0 0
    %570 = vmatprep.mubr.bf16.mxu0 0
    %571 = vmatmul.mubr.bf16.gmra.mrb[0].mxu0 %v211
    %v572 = vpop.f32.mrb[0].mxu0
    %v573 = vadd.f32 0.0, %v572
    %v574 = vpop.f32.mrb[0].mxu0
    %v575 = vpop.f32.mrb[0].mxu0
    %v576 = vadd.f32 0.0, %v575
    %v577 = vpop.f32.mrb[0].mxu0
    %578 = vmatprep.mubr.bf16.mxu0 0
    %579 = vmatmul.mubr.bf16.gmra.mrb[0].mxu0 %v214
    %v580 = vpop.f32.mrb[0].mxu0
    %v581 = vadd.f32 0.0, %v580
    %v582 = vpop.f32.mrb[0].mxu0
    %v583 = vpop.f32.mrb[0].mxu0
    %v584 = vpop.f32.mrb[0].mxu0
    %585 = vdwg.mxu0
    %v586 = vpack.c.bf16 %v576, %v573
    %v587 = vpack.c.bf16 %v581, %v581
    %v589 = vsel %vm270, %v587, 0
    %591 = vmatprep.subr.bf16.mxu0 0
    %592 = vmatpush1.bf16.msra.mxu0 %v586
    %593 = vmatprep.subr.bf16.mxu0 0
    %594 = vmatpush1.bf16.msra.mxu0 %v589
    %595 = vmatprep.subr.bf16.mxu0 0
    %596 = vmatpush1.bf16.msra.mxu0 0
    %597 = vmatprep.subr.bf16.mxu0 0
    %598 = vmatpush1.bf16.msra.mxu0 0
    %599 = vmatprep.subr.bf16.mxu0 0
    %600 = vmatpush1.bf16.msra.mxu0 0
    %601 = vmatprep.subr.bf16.mxu0 0
    %602 = vmatpush1.bf16.msra.mxu0 0
    %603 = vmatprep.subr.bf16.mxu0 0
    %604 = vmatpush1.bf16.msra.mxu0 0
    %605 = vmatprep.subr.bf16.mxu0 0
    %606 = vmatpush1.bf16.msra.mxu0 0
    %607 = vmatprep.subr.bf16.mxu0 0
    %608 = vmatpush1.bf16.msra.mxu0 0
    %609 = vmatprep.subr.bf16.mxu0 0
    %610 = vmatpush1.bf16.msra.mxu0 0
    %611 = vmatprep.subr.bf16.mxu0 0
    %612 = vmatpush1.bf16.msra.mxu0 0
    %613 = vmatprep.subr.bf16.mxu0 0
    %614 = vmatpush1.bf16.msra.mxu0 0
    %615 = vmatprep.subr.bf16.mxu0 0
    %616 = vmatpush1.bf16.msra.mxu0 0
    %617 = vmatprep.subr.bf16.mxu0 0
    %618 = vmatpush1.bf16.msra.mxu0 0
    %619 = vmatprep.subr.bf16.mxu0 0
    %620 = vmatpush1.bf16.msra.mxu0 0
    %621 = vmatprep.subr.bf16.mxu0 0
    %622 = vmatpush1.bf16.msra.mxu0 0
    %623 = vmatprep.mubr.bf16.mxu0 0
    %624 = vmatmul.mubr.bf16.gmra.mrb[0].mxu0 %v268
    %v625 = vpop.f32.mrb[0].mxu0
    %v626 = vadd.f32 %v529, %v625
    %v627 = vpop.f32.mrb[0].mxu0
    %v628 = vpop.f32.mrb[0].mxu0
    %v629 = vadd.f32 %v534, %v628
    %v630 = vpop.f32.mrb[0].mxu0
    %631 = vdwg.mxu0
    %634 = vrot.lane.b32.xlu0 %v626, 32
    %v635 = vpop.permute.xlu0 %634
    %636 = vrot.lane.b32.xlu0 %v629, 32
    %v637 = vpop.permute.xlu0 %636
    %v640 = vsel %vm323, %v529, %v635
    %v641 = vsel %vm323, %v534, %v637
    %v642 = vlaneseq
    %v643 = vshrl.u32 %v642, 7
    %v644 = vsub.s32 5, %v643
    %v645 = vrot.slane %v74, %v644
    %v647 = vsel %vm87, %v640, 0
    %v650 = vsel %vm87, %v641, 0
    %652 = vmatprep.subr.mxu0 0.0
    %653 = vmatpush1.msra.mxu0 %v54
    %654 = vmatprep.subr.mxu0 0.0
    %655 = vmatpush1.msra.mxu0 %v55
    %656 = vmatprep.subr.mxu0 0.0
    %657 = vmatpush1.msra.mxu0 %v56
    %658 = vmatprep.subr.mxu0 0.0
    %659 = vmatpush1.msra.mxu0 %v57
    %660 = vmatprep.subr.mxu0 0.0
    %661 = vmatpush1.msra.mxu0 %v58
    %662 = vmatprep.subr.mxu0 0.0
    %663 = vmatpush1.msra.mxu0 %v59
    %664 = vmatprep.subr.mxu0 0.0
    %665 = vmatpush1.msra.mxu0 %v60
    %666 = vmatprep.subr.mxu0 0.0
    %667 = vmatpush1.msra.mxu0 %v61
    %668 = vmatprep.subr.mxu0 0.0
    %669 = vmatpush1.msra.mxu0 0.0
    %670 = vmatprep.subr.mxu0 0.0
    %671 = vmatpush1.msra.mxu0 0.0
    %672 = vmatprep.subr.mxu0 0.0
    %673 = vmatpush1.msra.mxu0 0.0
    %674 = vmatprep.subr.mxu0 0.0
    %675 = vmatpush1.msra.mxu0 0.0
    %676 = vmatprep.subr.mxu0 0.0
    %677 = vmatpush1.msra.mxu0 0.0
    %678 = vmatprep.subr.mxu0 0.0
    %679 = vmatpush1.msra.mxu0 0.0
    %680 = vmatprep.subr.mxu0 0.0
    %681 = vmatpush1.msra.mxu0 0.0
    %682 = vmatprep.subr.mxu0 0.0
    %683 = vmatpush1.msra.mxu0 0.0
    %684 = vmatprep.subr.mxu0 0.0
    %685 = vmatpush1.msra.mxu0 0.0
    %686 = vmatprep.subr.mxu0 0.0
    %687 = vmatpush1.msra.mxu0 0.0
    %688 = vmatprep.subr.mxu0 0.0
    %689 = vmatpush1.msra.mxu0 0.0
    %690 = vmatprep.subr.mxu0 0.0
    %691 = vmatpush1.msra.mxu0 0.0
    %692 = vmatprep.subr.mxu0 0.0
    %693 = vmatpush1.msra.mxu0 0.0
    %694 = vmatprep.subr.mxu0 0.0
    %695 = vmatpush1.msra.mxu0 0.0
    %696 = vmatprep.subr.mxu0 0.0
    %697 = vmatpush1.msra.mxu0 0.0
    %698 = vmatprep.subr.mxu0 0.0
    %699 = vmatpush1.msra.mxu0 0.0
    %700 = vmatprep.subr.mxu0 0.0
    %701 = vmatpush1.msra.mxu0 0.0
    %702 = vmatprep.subr.mxu0 0.0
    %703 = vmatpush1.msra.mxu0 0.0
    %704 = vmatprep.subr.mxu0 0.0
    %705 = vmatpush1.msra.mxu0 0.0
    %706 = vmatprep.subr.mxu0 0.0
    %707 = vmatpush1.msra.mxu0 0.0
    %708 = vmatprep.subr.mxu0 0.0
    %709 = vmatpush1.msra.mxu0 0.0
    %710 = vmatprep.subr.mxu0 0.0
    %711 = vmatpush1.msra.mxu0 0.0
    %712 = vmatprep.subr.mxu0 0.0
    %713 = vmatpush1.msra.mxu0 0.0
    %714 = vmatprep.subr.mxu0 0.0
    %715 = vmatpush1.msra.mxu0 0.0
    %716 = vmatprep.mubr.f32.mxu0 0.0
    %717 = vmatmul.mubr.f32.gmra.mrb[0].mxu0 %v647
    %v718 = vpop.f32.mrb[0].mxu0
    %v719 = vadd.f32 %v645, %v718
    %v720 = vpop.f32.mrb[0].mxu0
    %721 = vmatprep.mubr.f32.mxu0 0.0
    %722 = vmatmul.mubr.f32.gmra.mrb[0].mxu0 %v650
    %v723 = vpop.f32.mrb[0].mxu0
    %v724 = vadd.f32 %v645, %v723
    %v725 = vpop.f32.mrb[0].mxu0
    %726 = vdwg.mxu0
    %v727 = vmax.f32 %v719, 0.0
    %v728 = vmax.f32 %v724, 0.0
    %v729 = vsel %vm323, %v727, 0.0
    %730 = vadd.xlane.f32.xlu0 %v729
    %v731 = vpop.xlane.xlu0 %730
    %v732 = vsel %vm323, %v728, 0.0
    %733 = vadd.xlane.f32.xlu0 %v732
    %v734 = vpop.xlane.xlu0 %733
    %v735 = vmul.f32 %v731, %v419
    %v736 = vmul.f32 %v734, %v419
    %v737 = vsub.f32 %v727, %v735
    %v738 = vsub.f32 %v728, %v736
    %v739 = vmul.f32 %v737, %v737
    %v740 = vmul.f32 %v738, %v738
    %v741 = vsel %vm323, %v739, 0.0
    %742 = vadd.xlane.f32.xlu0 %v741
    %v743 = vpop.xlane.xlu0 %742
    %v744 = vsel %vm323, %v740, 0.0
    %745 = vadd.xlane.f32.xlu0 %v744
    %v746 = vpop.xlane.xlu0 %745
    %v747 = vmul.f32 %v743, %v419
    %v748 = vmul.f32 %v746, %v419
    %v749 = vadd.f32 %v747, 1e-05
    %v750 = vadd.f32 %v748, 1e-05
    %v751 = vrsqrt.pop %v749
    %v752 = vrsqrt.pop %v750
    %v753 = vmul.f32 %v737, %v751
    %v754 = vmul.f32 %v738, %v752
    %v755 = vlaneseq
    %v756 = vshrl.u32 %v755, 7
    %v757 = vsub.s32 6, %v756
    %v758 = vrot.slane %v74, %v757
    %v759 = vmul.f32 %v753, %v758
    %v760 = vmul.f32 %v754, %v758
    %v761 = vlaneseq
    %v762 = vshrl.u32 %v761, 7
    %v763 = vsub.s32 7, %v762
    %v764 = vrot.slane %v74, %v763
    %v765 = vadd.f32 %v759, %v764
    %v766 = vadd.f32 %v760, %v764
    %767 = vset.pattern.permute.xlu0 0
    %768 = vperm.xlu0 %767, %v79
    %v769 = vpop.permute.xlu0 %768
    %770 = vset.pattern.permute.xlu0 0
    %771 = vperm.xlu0 %770, %v80
    %v772 = vpop.permute.xlu0 %771
    %vm773 = vcmp.eq.s32.totalorder %v769, %v174
    %vm774 = vcmp.eq.s32.totalorder %v772, %v174
    %v775 = vsel %vm773, 1, 0
    %v776 = vsel %vm774, 1, 0
    %v777 = vcvt.s32.f32 %v775
    %v778 = vcvt.s32.f32 %v776
    %v779 = vlaneseq
    %v780 = vshrl.u32 %v779, 7
    %v781 = vsub.s32 0, %v780
    %v782 = vrot.slane %v78, %v781
    %vm783 = vcmp.eq.s32.totalorder %v782, %v196
    %v784 = vsel %vm783, 1, 0
    %v785 = vcvt.s32.f32 %v784
    %v786 = vlaneseq
    %v787 = vshrl.u32 %v786, 7
    %v788 = vsub.s32 0, %v787
    %v789 = vrot.slane %v75, %v788
    %v791 = vsel %vm323, %v765, 0
    %v794 = vsel %vm323, %v766, 0
    %796 = vmatprep.subr.mxu0 0.0
    %797 = vmatpush1.msra.mxu0 %v62
    %798 = vmatprep.subr.mxu0 0.0
    %799 = vmatpush1.msra.mxu0 %v63
    %800 = vmatprep.subr.mxu0 0.0
    %801 = vmatpush1.msra.mxu0 %v64
    %802 = vmatprep.subr.mxu0 0.0
    %803 = vmatpush1.msra.mxu0 %v65
    %804 = vmatprep.subr.mxu0 0.0
    %805 = vmatpush1.msra.mxu0 0.0
    %806 = vmatprep.subr.mxu0 0.0
    %807 = vmatpush1.msra.mxu0 0.0
    %808 = vmatprep.subr.mxu0 0.0
    %809 = vmatpush1.msra.mxu0 0.0
    %810 = vmatprep.subr.mxu0 0.0
    %811 = vmatpush1.msra.mxu0 0.0
    %812 = vmatprep.subr.mxu0 0.0
    %813 = vmatpush1.msra.mxu0 0.0
    %814 = vmatprep.subr.mxu0 0.0
    %815 = vmatpush1.msra.mxu0 0.0
    %816 = vmatprep.subr.mxu0 0.0
    %817 = vmatpush1.msra.mxu0 0.0
    %818 = vmatprep.subr.mxu0 0.0
    %819 = vmatpush1.msra.mxu0 0.0
    %820 = vmatprep.subr.mxu0 0.0
    %821 = vmatpush1.msra.mxu0 0.0
    %822 = vmatprep.subr.mxu0 0.0
    %823 = vmatpush1.msra.mxu0 0.0
    %824 = vmatprep.subr.mxu0 0.0
    %825 = vmatpush1.msra.mxu0 0.0
    %826 = vmatprep.subr.mxu0 0.0
    %827 = vmatpush1.msra.mxu0 0.0
    %828 = vmatprep.subr.mxu0 0.0
    %829 = vmatpush1.msra.mxu0 0.0
    %830 = vmatprep.subr.mxu0 0.0
    %831 = vmatpush1.msra.mxu0 0.0
    %832 = vmatprep.subr.mxu0 0.0
    %833 = vmatpush1.msra.mxu0 0.0
    %834 = vmatprep.subr.mxu0 0.0
    %835 = vmatpush1.msra.mxu0 0.0
    %836 = vmatprep.subr.mxu0 0.0
    %837 = vmatpush1.msra.mxu0 0.0
    %838 = vmatprep.subr.mxu0 0.0
    %839 = vmatpush1.msra.mxu0 0.0
    %840 = vmatprep.subr.mxu0 0.0
    %841 = vmatpush1.msra.mxu0 0.0
    %842 = vmatprep.subr.mxu0 0.0
    %843 = vmatpush1.msra.mxu0 0.0
    %844 = vmatprep.subr.mxu0 0.0
    %845 = vmatpush1.msra.mxu0 0.0
    %846 = vmatprep.subr.mxu0 0.0
    %847 = vmatpush1.msra.mxu0 0.0
    %848 = vmatprep.subr.mxu0 0.0
    %849 = vmatpush1.msra.mxu0 0.0
    %850 = vmatprep.subr.mxu0 0.0
    %851 = vmatpush1.msra.mxu0 0.0
    %852 = vmatprep.subr.mxu0 0.0
    %853 = vmatpush1.msra.mxu0 0.0
    %854 = vmatprep.subr.mxu0 0.0
    %855 = vmatpush1.msra.mxu0 0.0
    %856 = vmatprep.subr.mxu0 0.0
    %857 = vmatpush1.msra.mxu0 0.0
    %858 = vmatprep.subr.mxu0 0.0
    %859 = vmatpush1.msra.mxu0 0.0
    %860 = vmatprep.mubr.f32.mxu0 0.0
    %861 = vmatmul.mubr.f32.gmra.mrb[0].mxu0 %v791
    %v862 = vpop.f32.mrb[0].mxu0
    %v863 = vadd.f32 %v789, %v862
    %v864 = vpop.f32.mrb[0].mxu0
    %865 = vmatprep.mubr.f32.mxu0 0.0
    %866 = vmatmul.mubr.f32.gmra.mrb[0].mxu0 %v794
    %v867 = vpop.f32.mrb[0].mxu0
    %v868 = vadd.f32 %v789, %v867
    %v869 = vpop.f32.mrb[0].mxu0
    %870 = vdwg.mxu0
    %v871 = vmax.f32 %v863, 0.0
    %v872 = vmax.f32 %v868, 0.0
    %v873 = vlaneseq
    %v874 = vshrl.u32 %v873, 7
    %v875 = vsub.s32 1, %v874
    %v876 = vrot.slane %v75, %v875
    %v877 = vmul.f32 %v871, %v876
    %v878 = vmul.f32 %v872, %v876
    %v879 = vsel %vm209, %v877, 0.0
    %880 = vadd.xlane.f32.xlu0 %v879
    %v881 = vpop.xlane.xlu0 %880
    %v882 = vsel %vm209, %v878, 0.0
    %883 = vadd.xlane.f32.xlu0 %v882
    %v884 = vpop.xlane.xlu0 %883
    %v885 = vlaneseq
    %v886 = vshrl.u32 %v885, 7
    %v887 = vsub.s32 2, %v886
    %v888 = vrot.slane %v75, %v887
    %v889 = vadd.f32 %v881, %v888
    %v890 = vadd.f32 %v884, %v888
    %892 = vset.pattern.permute.xlu0 0
    %893 = vperm.xlu0 %892, %v889
    %v894 = vpop.permute.xlu0 %893
    %897 = vset.pattern.permute.xlu0 0
    %898 = vperm.xlu0 %897, %v890
    %v899 = vpop.permute.xlu0 %898
    %v901 = vsel %vm773, %v894, -1e+30
    %v902 = vsel %vm774, %v899, -1e+30
    %vm903 = vcmask 15360
    %v904 = vsel %vm903, %v901, -inf
    %v905 = vsel %vm903, %v902, -inf
    %v906 = vmax.f32 %v904, %v905
    %v907 = vrot.slane %v906, 4
    %v908 = vmax.f32 %v906, %v907
    %v909 = vrot.slane %v908, 2
    %v910 = vmax.f32 %v908, %v909
    %v911 = vrot.slane %v910, 1
    %v912 = vmax.f32 %v910, %v911
    %v913 = vmul.f32 %v777, %v912
    %v914 = vmul.f32 %v778, %v912
    %v915 = vsel %vm903, %v913, 0.0
    %916 = vadd.xlane.f32.xlu0 %v915
    %v917 = vpop.xlane.xlu0 %916
    %v918 = vsel %vm903, %v914, 0.0
    %919 = vadd.xlane.f32.xlu0 %v918
    %v920 = vpop.xlane.xlu0 %919
    %v921 = vsub.f32 %v889, %v917
    %v922 = vsub.f32 %v890, %v920
    %v923 = vmul.f32 %v921, 1.442695
    %v924 = vpow.pop %v923
    %v925 = vmul.f32 %v922, 1.442695
    %v926 = vpow.pop %v925
    %928 = vset.pattern.permute.xlu0 0
    %929 = vperm.xlu0 %928, %v924
    %v930 = vpop.permute.xlu0 %929
    %933 = vset.pattern.permute.xlu0 0
    %934 = vperm.xlu0 %933, %v926
    %v935 = vpop.permute.xlu0 %934
    %v937 = vmul.f32 %v765, %v930
    %v938 = vmul.f32 %v766, %v935
    %939 = vrot.lane.b32.xlu0 %v924, 32
    %v940 = vpop.permute.xlu0 %939
    %941 = vrot.lane.b32.xlu0 %v926, 32
    %v942 = vpop.permute.xlu0 %941
    %v945 = vsel %vm323, %v937, %v940
    %v946 = vsel %vm323, %v938, %v942
    %v948 = vsel %vm209, %v785, 0
    %950 = vmatprep.subr.mxu0 0.0
    %951 = vmatpush1.msra.mxu0 %v945
    %952 = vmatprep.subr.mxu0 0.0
    %953 = vmatpush1.msra.mxu0 %v946
    %954 = vmatprep.subr.mxu0 0.0
    %955 = vmatpush1.msra.mxu0 0.0
    %956 = vmatprep.subr.mxu0 0.0
    %957 = vmatpush1.msra.mxu0 0.0
    %958 = vmatprep.subr.mxu0 0.0
    %959 = vmatpush1.msra.mxu0 0.0
    %960 = vmatprep.subr.mxu0 0.0
    %961 = vmatpush1.msra.mxu0 0.0
    %962 = vmatprep.subr.mxu0 0.0
    %963 = vmatpush1.msra.mxu0 0.0
    %964 = vmatprep.subr.mxu0 0.0
    %965 = vmatpush1.msra.mxu0 0.0
    %966 = vmatprep.subr.mxu0 0.0
    %967 = vmatpush1.msra.mxu0 0.0
    %968 = vmatprep.subr.mxu0 0.0
    %969 = vmatpush1.msra.mxu0 0.0
    %970 = vmatprep.subr.mxu0 0.0
    %971 = vmatpush1.msra.mxu0 0.0
    %972 = vmatprep.subr.mxu0 0.0
    %973 = vmatpush1.msra.mxu0 0.0
    %974 = vmatprep.subr.mxu0 0.0
    %975 = vmatpush1.msra.mxu0 0.0
    %976 = vmatprep.subr.mxu0 0.0
    %977 = vmatpush1.msra.mxu0 0.0
    %978 = vmatprep.subr.mxu0 0.0
    %979 = vmatpush1.msra.mxu0 0.0
    %980 = vmatprep.subr.mxu0 0.0
    %981 = vmatpush1.msra.mxu0 0.0
    %982 = vmatprep.subr.mxu0 0.0
    %983 = vmatpush1.msra.mxu0 0.0
    %984 = vmatprep.subr.mxu0 0.0
    %985 = vmatpush1.msra.mxu0 0.0
    %986 = vmatprep.subr.mxu0 0.0
    %987 = vmatpush1.msra.mxu0 0.0
    %988 = vmatprep.subr.mxu0 0.0
    %989 = vmatpush1.msra.mxu0 0.0
    %990 = vmatprep.subr.mxu0 0.0
    %991 = vmatpush1.msra.mxu0 0.0
    %992 = vmatprep.subr.mxu0 0.0
    %993 = vmatpush1.msra.mxu0 0.0
    %994 = vmatprep.subr.mxu0 0.0
    %995 = vmatpush1.msra.mxu0 0.0
    %996 = vmatprep.subr.mxu0 0.0
    %997 = vmatpush1.msra.mxu0 0.0
    %998 = vmatprep.subr.mxu0 0.0
    %999 = vmatpush1.msra.mxu0 0.0
    %1000 = vmatprep.subr.mxu0 0.0
    %1001 = vmatpush1.msra.mxu0 0.0
    %1002 = vmatprep.subr.mxu0 0.0
    %1003 = vmatpush1.msra.mxu0 0.0
    %1004 = vmatprep.subr.mxu0 0.0
    %1005 = vmatpush1.msra.mxu0 0.0
    %1006 = vmatprep.subr.mxu0 0.0
    %1007 = vmatpush1.msra.mxu0 0.0
    %1008 = vmatprep.subr.mxu0 0.0
    %1009 = vmatpush1.msra.mxu0 0.0
    %1010 = vmatprep.subr.mxu0 0.0
    %1011 = vmatpush1.msra.mxu0 0.0
    %1012 = vmatprep.subr.mxu0 0.0
    %1013 = vmatpush1.msra.mxu0 0.0
    %1014 = vmatprep.mubr.f32.mxu0 0.0
    %1015 = vmatmul.mubr.f32.gmra.mrb[0].mxu0 %v948
    %v1016 = vpop.f32.mrb[0].mxu0
    %v1017 = vadd.f32 0.0, %v1016
    %v1018 = vpop.f32.mrb[0].mxu0
    %1019 = vdwg.mxu0
    %v1020 = vmax.f32 %v1017, 1e-30
    %1022 = vset.pattern.permute.xlu0 32
    %1023 = vperm.xlu0 %1022, %v1020
    %v1024 = vpop.permute.xlu0 %1023
    %v1026 = vrcp.pop %v1024
    %v1027 = vmul.f32 %v1017, %v1026
    %v1028 = vlaneseq
    %v1029 = vshrl.u32 %v1028, 7
    %v1030 = vsub.s32 0, %v1029
    %v1031 = vrot.slane %v77, %v1030
    %vm1032 = vcmp.eq.s32.totalorder %v1031, %v196
    %v1033 = vsel %vm1032, 1, 0
    %v1034 = vcvt.s32.f32 %v1033
    %v1035 = vld [vmem:[%s1] sm:$0xff]
    %v1036 = vld [vmem:[%s1 + $0x8] sm:$0xff]
    %v1037 = vld [vmem:[%s1 + $0x10] sm:$0xff]
    %v1039 = vsel %vm266, %v1034, 0
    %1041 = vmatprep.subr.mxu0 0.0
    %1042 = vmatpush1.msra.mxu0 %v1035
    %1043 = vmatprep.subr.mxu0 0.0
    %1044 = vmatpush1.msra.mxu0 %v1036
    %1045 = vmatprep.subr.mxu0 0.0
    %1046 = vmatpush1.msra.mxu0 %v1037
    %1047 = vmatprep.subr.mxu0 0.0
    %1048 = vmatpush1.msra.mxu0 0.0
    %1049 = vmatprep.subr.mxu0 0.0
    %1050 = vmatpush1.msra.mxu0 0.0
    %1051 = vmatprep.subr.mxu0 0.0
    %1052 = vmatpush1.msra.mxu0 0.0
    %1053 = vmatprep.subr.mxu0 0.0
    %1054 = vmatpush1.msra.mxu0 0.0
    %1055 = vmatprep.subr.mxu0 0.0
    %1056 = vmatpush1.msra.mxu0 0.0
    %1057 = vmatprep.subr.mxu0 0.0
    %1058 = vmatpush1.msra.mxu0 0.0
    %1059 = vmatprep.subr.mxu0 0.0
    %1060 = vmatpush1.msra.mxu0 0.0
    %1061 = vmatprep.subr.mxu0 0.0
    %1062 = vmatpush1.msra.mxu0 0.0
    %1063 = vmatprep.subr.mxu0 0.0
    %1064 = vmatpush1.msra.mxu0 0.0
    %1065 = vmatprep.subr.mxu0 0.0
    %1066 = vmatpush1.msra.mxu0 0.0
    %1067 = vmatprep.subr.mxu0 0.0
    %1068 = vmatpush1.msra.mxu0 0.0
    %1069 = vmatprep.subr.mxu0 0.0
    %1070 = vmatpush1.msra.mxu0 0.0
    %1071 = vmatprep.subr.mxu0 0.0
    %1072 = vmatpush1.msra.mxu0 0.0
    %1073 = vmatprep.subr.mxu0 0.0
    %1074 = vmatpush1.msra.mxu0 0.0
    %1075 = vmatprep.subr.mxu0 0.0
    %1076 = vmatpush1.msra.mxu0 0.0
    %1077 = vmatprep.subr.mxu0 0.0
    %1078 = vmatpush1.msra.mxu0 0.0
    %1079 = vmatprep.subr.mxu0 0.0
    %1080 = vmatpush1.msra.mxu0 0.0
    %1081 = vmatprep.subr.mxu0 0.0
    %1082 = vmatpush1.msra.mxu0 0.0
    %1083 = vmatprep.subr.mxu0 0.0
    %1084 = vmatpush1.msra.mxu0 0.0
    %1085 = vmatprep.subr.mxu0 0.0
    %1086 = vmatpush1.msra.mxu0 0.0
    %1087 = vmatprep.subr.mxu0 0.0
    %1088 = vmatpush1.msra.mxu0 0.0
    %1089 = vmatprep.subr.mxu0 0.0
    %1090 = vmatpush1.msra.mxu0 0.0
    %1091 = vmatprep.subr.mxu0 0.0
    %1092 = vmatpush1.msra.mxu0 0.0
    %1093 = vmatprep.subr.mxu0 0.0
    %1094 = vmatpush1.msra.mxu0 0.0
    %1095 = vmatprep.subr.mxu0 0.0
    %1096 = vmatpush1.msra.mxu0 0.0
    %1097 = vmatprep.subr.mxu0 0.0
    %1098 = vmatpush1.msra.mxu0 0.0
    %1099 = vmatprep.subr.mxu0 0.0
    %1100 = vmatpush1.msra.mxu0 0.0
    %1101 = vmatprep.subr.mxu0 0.0
    %1102 = vmatpush1.msra.mxu0 0.0
    %1103 = vmatprep.subr.mxu0 0.0
    %1104 = vmatpush1.msra.mxu0 0.0
    %1105 = vmatprep.mubr.f32.mxu0 0.0
    %1106 = vmatmul.mubr.f32.gmra.mrb[0].mxu0 %v1039
    %v1107 = vpop.f32.mrb[0].mxu0
    %v1108 = vadd.f32 0.0, %v1107
    %v1109 = vpop.f32.mrb[0].mxu0
    %1110 = vdwg.mxu0
    %v1111 = vlaneseq
    %v1112 = vshrl.u32 %v1111, 7
    %v1113 = vsub.s32 3, %v1112
    %v1114 = vrot.slane %v75, %v1113
    %v1116 = vsel %vm87, %v1108, 0
    %1118 = vmatprep.subr.mxu0 0.0
    %1119 = vmatpush1.msra.mxu0 %v66
    %1120 = vmatprep.subr.mxu0 0.0
    %1121 = vmatpush1.msra.mxu0 %v67
    %1122 = vmatprep.subr.mxu0 0.0
    %1123 = vmatpush1.msra.mxu0 %v68
    %1124 = vmatprep.subr.mxu0 0.0
    %1125 = vmatpush1.msra.mxu0 %v69
    %1126 = vmatprep.subr.mxu0 0.0
    %1127 = vmatpush1.msra.mxu0 %v70
    %1128 = vmatprep.subr.mxu0 0.0
    %1129 = vmatpush1.msra.mxu0 %v71
    %1130 = vmatprep.subr.mxu0 0.0
    %1131 = vmatpush1.msra.mxu0 %v72
    %1132 = vmatprep.subr.mxu0 0.0
    %1133 = vmatpush1.msra.mxu0 %v73
    %1134 = vmatprep.subr.mxu0 0.0
    %1135 = vmatpush1.msra.mxu0 0.0
    %1136 = vmatprep.subr.mxu0 0.0
    %1137 = vmatpush1.msra.mxu0 0.0
    %1138 = vmatprep.subr.mxu0 0.0
    %1139 = vmatpush1.msra.mxu0 0.0
    %1140 = vmatprep.subr.mxu0 0.0
    %1141 = vmatpush1.msra.mxu0 0.0
    %1142 = vmatprep.subr.mxu0 0.0
    %1143 = vmatpush1.msra.mxu0 0.0
    %1144 = vmatprep.subr.mxu0 0.0
    %1145 = vmatpush1.msra.mxu0 0.0
    %1146 = vmatprep.subr.mxu0 0.0
    %1147 = vmatpush1.msra.mxu0 0.0
    %1148 = vmatprep.subr.mxu0 0.0
    %1149 = vmatpush1.msra.mxu0 0.0
    %1150 = vmatprep.subr.mxu0 0.0
    %1151 = vmatpush1.msra.mxu0 0.0
    %1152 = vmatprep.subr.mxu0 0.0
    %1153 = vmatpush1.msra.mxu0 0.0
    %1154 = vmatprep.subr.mxu0 0.0
    %1155 = vmatpush1.msra.mxu0 0.0
    %1156 = vmatprep.subr.mxu0 0.0
    %1157 = vmatpush1.msra.mxu0 0.0
    %1158 = vmatprep.subr.mxu0 0.0
    %1159 = vmatpush1.msra.mxu0 0.0
    %1160 = vmatprep.subr.mxu0 0.0
    %1161 = vmatpush1.msra.mxu0 0.0
    %1162 = vmatprep.subr.mxu0 0.0
    %1163 = vmatpush1.msra.mxu0 0.0
    %1164 = vmatprep.subr.mxu0 0.0
    %1165 = vmatpush1.msra.mxu0 0.0
    %1166 = vmatprep.subr.mxu0 0.0
    %1167 = vmatpush1.msra.mxu0 0.0
    %1168 = vmatprep.subr.mxu0 0.0
    %1169 = vmatpush1.msra.mxu0 0.0
    %1170 = vmatprep.subr.mxu0 0.0
    %1171 = vmatpush1.msra.mxu0 0.0
    %1172 = vmatprep.subr.mxu0 0.0
    %1173 = vmatpush1.msra.mxu0 0.0
    %1174 = vmatprep.subr.mxu0 0.0
    %1175 = vmatpush1.msra.mxu0 0.0
    %1176 = vmatprep.subr.mxu0 0.0
    %1177 = vmatpush1.msra.mxu0 0.0
    %1178 = vmatprep.subr.mxu0 0.0
    %1179 = vmatpush1.msra.mxu0 0.0
    %1180 = vmatprep.subr.mxu0 0.0
    %1181 = vmatpush1.msra.mxu0 0.0
    %1182 = vmatprep.mubr.f32.mxu0 0.0
    %1183 = vmatmul.mubr.f32.gmra.mrb[0].mxu0 %v1116
    %v1184 = vpop.f32.mrb[0].mxu0
    %v1185 = vadd.f32 %v1114, %v1184
    %v1186 = vpop.f32.mrb[0].mxu0
    %1187 = vdwg.mxu0
    %v1188 = vmax.f32 %v1185, 0.0
    %1190 = vrot.lane.b32.xlu0 %v1188, 32
    %v1191 = vpop.permute.xlu0 %1190
    %v1193 = vsel %vm323, %v1027, %v1191
    %v1194 = vld [vmem:[%s8] sm:$0xff]
    %v1195 = vld [vmem:[%s8 + $0x8] sm:$0xff]
    %v1196 = vld [vmem:[%s8 + $0x10] sm:$0xff]
    %v1197 = vld [vmem:[%s8 + $0x18] sm:$0xff]
    %v1198 = vld [vmem:[%s8 + $0x20] sm:$0xff]
    %v1199 = vld [vmem:[%s8 + $0x28] sm:$0xff]
    %v1200 = vlaneseq
    %v1201 = vshrl.u32 %v1200, 7
    %v1202 = vsub.s32 4, %v1201
    %v1203 = vrot.slane %v75, %v1202
    %vm1204 = vcmask 392192
    %v1206 = vsel %vm1204, %v1193, 0
    %1208 = vmatprep.subr.mxu0 0.0
    %1209 = vmatpush1.msra.mxu0 %v1194
    %1210 = vmatprep.subr.mxu0 0.0
    %1211 = vmatpush1.msra.mxu0 %v1195
    %1212 = vmatprep.subr.mxu0 0.0
    %1213 = vmatpush1.msra.mxu0 %v1196
    %1214 = vmatprep.subr.mxu0 0.0
    %1215 = vmatpush1.msra.mxu0 %v1197
    %1216 = vmatprep.subr.mxu0 0.0
    %1217 = vmatpush1.msra.mxu0 %v1198
    %1218 = vmatprep.subr.mxu0 0.0
    %1219 = vmatpush1.msra.mxu0 %v1199
    %1220 = vmatprep.subr.mxu0 0.0
    %1221 = vmatpush1.msra.mxu0 0.0
    %1222 = vmatprep.subr.mxu0 0.0
    %1223 = vmatpush1.msra.mxu0 0.0
    %1224 = vmatprep.subr.mxu0 0.0
    %1225 = vmatpush1.msra.mxu0 0.0
    %1226 = vmatprep.subr.mxu0 0.0
    %1227 = vmatpush1.msra.mxu0 0.0
    %1228 = vmatprep.subr.mxu0 0.0
    %1229 = vmatpush1.msra.mxu0 0.0
    %1230 = vmatprep.subr.mxu0 0.0
    %1231 = vmatpush1.msra.mxu0 0.0
    %1232 = vmatprep.subr.mxu0 0.0
    %1233 = vmatpush1.msra.mxu0 0.0
    %1234 = vmatprep.subr.mxu0 0.0
    %1235 = vmatpush1.msra.mxu0 0.0
    %1236 = vmatprep.subr.mxu0 0.0
    %1237 = vmatpush1.msra.mxu0 0.0
    %1238 = vmatprep.subr.mxu0 0.0
    %1239 = vmatpush1.msra.mxu0 0.0
    %1240 = vmatprep.subr.mxu0 0.0
    %1241 = vmatpush1.msra.mxu0 0.0
    %1242 = vmatprep.subr.mxu0 0.0
    %1243 = vmatpush1.msra.mxu0 0.0
    %1244 = vmatprep.subr.mxu0 0.0
    %1245 = vmatpush1.msra.mxu0 0.0
    %1246 = vmatprep.subr.mxu0 0.0
    %1247 = vmatpush1.msra.mxu0 0.0
    %1248 = vmatprep.subr.mxu0 0.0
    %1249 = vmatpush1.msra.mxu0 0.0
    %1250 = vmatprep.subr.mxu0 0.0
    %1251 = vmatpush1.msra.mxu0 0.0
    %1252 = vmatprep.subr.mxu0 0.0
    %1253 = vmatpush1.msra.mxu0 0.0
    %1254 = vmatprep.subr.mxu0 0.0
    %1255 = vmatpush1.msra.mxu0 0.0
    %1256 = vmatprep.subr.mxu0 0.0
    %1257 = vmatpush1.msra.mxu0 0.0
    %1258 = vmatprep.subr.mxu0 0.0
    %1259 = vmatpush1.msra.mxu0 0.0
    %1260 = vmatprep.subr.mxu0 0.0
    %1261 = vmatpush1.msra.mxu0 0.0
    %1262 = vmatprep.subr.mxu0 0.0
    %1263 = vmatpush1.msra.mxu0 0.0
    %1264 = vmatprep.subr.mxu0 0.0
    %1265 = vmatpush1.msra.mxu0 0.0
    %1266 = vmatprep.subr.mxu0 0.0
    %1267 = vmatpush1.msra.mxu0 0.0
    %1268 = vmatprep.subr.mxu0 0.0
    %1269 = vmatpush1.msra.mxu0 0.0
    %1270 = vmatprep.subr.mxu0 0.0
    %1271 = vmatpush1.msra.mxu0 0.0
    %1272 = vmatprep.mubr.f32.mxu0 0.0
    %1273 = vmatmul.mubr.f32.gmra.mrb[0].mxu0 %v1206
    %v1274 = vpop.f32.mrb[0].mxu0
    %v1275 = vadd.f32 %v1203, %v1274
    %v1276 = vpop.f32.mrb[0].mxu0
    %1277 = vdwg.mxu0
    %vm1278 = vcmask 123904
    %v1279 = vsel %vm1278, %v1275, 0.0
    %1280 = vadd.xlane.f32.xlu0 %v1279
    %v1281 = vpop.xlane.xlu0 %1280
    %v1282 = vrcp.pop 16.0
    %v1283 = vmul.f32 %v1281, %v1282
    %v1284 = vsub.f32 %v1275, %v1283
    %v1285 = vmul.f32 %v1284, %v1284
    %v1286 = vsel %vm1278, %v1285, 0.0
    %1287 = vadd.xlane.f32.xlu0 %v1286
    %v1288 = vpop.xlane.xlu0 %1287
    %v1289 = vmul.f32 %v1288, %v1282
    %v1290 = vadd.f32 %v1289, 1e-05
    %v1291 = vrsqrt.pop %v1290
    %v1292 = vmul.f32 %v1284, %v1291
    %v1293 = vlaneseq
    %v1294 = vshrl.u32 %v1293, 7
    %v1295 = vsub.s32 5, %v1294
    %v1296 = vrot.slane %v75, %v1295
    %v1297 = vmul.f32 %v1292, %v1296
    %v1298 = vlaneseq
    %v1299 = vshrl.u32 %v1298, 7
    %v1300 = vsub.s32 6, %v1299
    %v1301 = vrot.slane %v75, %v1300
    %v1302 = vadd.f32 %v1297, %v1301
    %1303 = vst.msk [vmem:[#allocation2] sm:$0x3] %vm1278, %v1302
    // Predicated region
    $region38: #{code_similarity_forward.1} parent=1 // pred_check
      _
    $region39: #{code_similarity_forward.1} parent=1 // pred_check_branch
      %1305 = sbr.rel (0) target = $region41
    $region40: #{code_similarity_forward.1} parent=1 // pred_region
      %s1307 = ssub.s32 32, 32
      %1308 = vsyncadd [#allocation3], %s1307
      %s1310 = sshll.u32 [#allocation2], 4
      %s1311 = int_to_ptr.vmem [resolvable:$true] %s1310
      %1313 = dma.vmem_to_hbm [thread:$0]  %s1311, 32, %s9, [#allocation3]
    $region41: #{code_similarity_forward.1} parent=1 // pred_fallthru
      _
    // Predicated region
    $region42: #{code_similarity_forward.1} parent=1 // pred_check
      _
    $region43: #{code_similarity_forward.1} parent=1 // pred_check_branch
      %1315 = sbr.rel (0) target = $region45
    $region44: #{code_similarity_forward.1} parent=1 // pred_region
      %1316 = dma.done [#allocation3], 32
    $region45: #{code_similarity_forward.1} parent=1 // pred_fallthru
      _
    %1317 = vsyncpa [#allocation3], 1

</llo_original>
